<compile_context>
chip_gen: v7x
topology: tpu7x:2x2x1
jax: 0.10.0
libtpu: 0.0.40
codegen_flags: <defaults>
</compile_context>

<pallas_src>
import functools
import numpy as np
import jax
import jax.numpy as jnp
from jax import lax
from jax.experimental import pallas as pl
from jax.experimental.pallas import tpu as pltpu


# ------------------------- deterministic small config -------------------------
class _NS:
    def __init__(self, **kw):
        self.__dict__.update(kw)


CFG = _NS(
    data=_NS(training_resolution=16, znear=0.8, zfar=3.2, fov=49.1,
             category="srn_cars"),
    model=_NS(max_sh_degree=1, isotropic=False, inverted_x=False,
              inverted_y=False, base_dim=32, num_blocks=2,
              depth_scale=1.0, xyz_scale=1.0, opacity_scale=1.0,
              scale_scale=1.0, depth_bias=0.0, xyz_bias=0.0,
              opacity_bias=0.0, scale_bias=0.02),
    cam_embd=_NS(embedding=None, dimension=0, encode_embedding=None),
)

# split_dimensions_with_offset: [depth, xyz-offset, opacity, scaling, rotation, features_dc] (+ SH)
SH_NUM = (CFG.model.max_sh_degree + 1) ** 2 - 1          # 3
SPLIT_DIMS = [1, 3, 1, 3, 4, 3, SH_NUM * 3]              # total 24
C_TOTAL = sum(SPLIT_DIMS)                                 # 24
_ROWS = 24                                                # packed slab rows (in == out)

_HIGHEST = jax.lax.Precision.HIGHEST

# Packed output-slab row layout (chosen to match the mixing-matrix output):
#   0-2 xyz | 3 w (pad, ignored) | 4-7 rotation | 8-16 features_rest (sh*3+rgb)
#   | 17 opacity | 18-20 scaling | 21-23 features_dc


def fov2focal(fov_rad, pixels):
    return pixels / (2.0 * np.tan(fov_rad / 2.0))


@functools.lru_cache(maxsize=None)
def _init_ray_dirs_cached(res, inverted_x, inverted_y, category, fov_deg):
    """Mirrors Text2SplatDecoder.init_ray_dirs; built once per config."""
    x = np.linspace(-(res // 2) + 0.5, res // 2 - 0.5, res).astype(np.float32)
    y = np.linspace(res // 2 - 0.5, -(res // 2) + 0.5, res).astype(np.float32)
    if inverted_x:
        x = -x
    if inverted_y:
        y = -y
    gx, gy = np.meshgrid(x, y, indexing="xy")
    ones = np.ones_like(gx)
    ray = np.stack([gx, gy, ones]).astype(np.float32)[None]   # [1,3,res,res]
    if category not in ["hydrants", "teddybears"]:
        ray[:, :2] /= fov2focal(fov_deg * np.pi / 180.0, res)
    return jnp.asarray(ray, jnp.float32)


def init_ray_dirs(cfg):
    return _init_ray_dirs_cached(cfg.data.training_resolution,
                                 bool(cfg.model.inverted_x),
                                 bool(cfg.model.inverted_y),
                                 cfg.data.category, float(cfg.data.fov))


# ------------------------ per-image channel-mixing matrix ----------------------
def _build_mix_matrices(cam, quat):
    """(B,24,24) matrices M such that  mixed = M @ pre_activated_block  performs:
       rows 0-3 : world xyz/w   = cam^T applied to [pos_cam, 1]
       rows 4-7 : quaternion left-multiply of the normalized rotation
       rows 8-16: SH order-1 transform of features_rest
       rows 17-23: passthrough of sigmoid(opacity), exp(scaling), features_dc
    pre_activated_block row layout (built in-kernel, same slot layout as input):
       0-2 pos_cam | 3 ones | 4 sigmoid(opa) | 5-7 exp(scl) | 8-11 normalized rot
       | 12-14 fdc | 15-23 raw features_rest
    """
    B = cam.shape[0]
    v_to_sh = jnp.array([[0., 0., -1.], [-1., 0., 0.], [0., 1., 0.]], jnp.float32)
    sh_to_v = v_to_sh.T
    # T[b, sh, shp]  (same contraction as transform_SHs)
    T = jnp.einsum("ij,bjk,kl->bil", sh_to_v, cam[:, :3, :3], v_to_sh,
                   precision=_HIGHEST)

    aw, ax, ay, az = quat[:, 0], quat[:, 1], quat[:, 2], quat[:, 3]
    L = jnp.stack([                              # quaternion_raw_multiply(a, .)
        jnp.stack([aw, -ax, -ay, -az], axis=-1),
        jnp.stack([ax,  aw, -az,  ay], axis=-1),
        jnp.stack([ay,  az,  aw, -ax], axis=-1),
        jnp.stack([az, -ay,  ax,  aw], axis=-1)], axis=1)          # (B,4,4)

    # SH 9x9 block: block[shp*3+rgb, sh*3+rgb'] = T[sh,shp] * delta(rgb,rgb')
    eye3 = jnp.eye(3, dtype=jnp.float32)
    sh_block = jnp.einsum("bps,rc->bprsc", jnp.transpose(T, (0, 2, 1)),
                          eye3).reshape(B, 9, 9)

    M = jnp.zeros((B, _ROWS, _ROWS), jnp.float32)
    M = M.at[:, 0:4, 0:4].set(jnp.transpose(cam, (0, 2, 1)))  # world[c]=sum_k cam[k,c]*pos_h[k]
    M = M.at[:, 4:8, 8:12].set(L)                             # rotation
    M = M.at[:, 8:17, 15:24].set(sh_block)                    # features_rest
    M = M.at[:, 17, 4].set(1.0)                               # opacity passthrough
    M = M.at[:, 18:21, 5:8].set(eye3)                         # scaling passthrough
    M = M.at[:, 21:24, 12:15].set(eye3)                       # features_dc passthrough
    return M


# --------------------------------- kernel ------------------------------------
def _splat_head_kernel(mix_ref, splat_ref, ray_ref, out_ref, *, bb, znear, zfar):
    """mix_ref: (BB,24,24) | splat_ref: (BB,24,TN) | ray_ref: (3,TN) | out_ref: (BB,24,TN)."""
    rd = ray_ref[...]                                           # (3, TN)
    for i in range(bb):                                         # static unroll, bb <= 8
        s = splat_ref[i]                                        # (24, TN)
        M = mix_ref[i]                                          # (24, 24)

        # ---- one dense EUP exp pass over [-depth, -opacity, scaling(3)] ----
        e = jnp.exp(jnp.concatenate([-s[0:1, :], -s[4:5, :], s[5:8, :]], axis=0))
        sig = 1.0 / (1.0 + e[0:2, :])                           # sigmoid(depth), sigmoid(opa)
        depth = sig[0:1, :] * (zfar - znear) + znear            # (1, TN)
        pos_cam = rd * depth + s[1:4, :]                        # ray_dirs*depth + offset
        ones = jnp.ones_like(depth)

        # ---- rotation F.normalize(dim=1): rsqrt on the EUP slot ----
        rot = s[8:12, :]
        rn = rot * lax.rsqrt(jnp.maximum(
            jnp.sum(rot * rot, axis=0, keepdims=True), 1e-24))

        # ---- pre-activated channel block; all channel mixes go to the MXU ----
        pre = jnp.concatenate(
            [pos_cam, ones, sig[1:2, :], e[2:5, :], rn, s[12:24, :]], axis=0)  # (24, TN)
        mixed = jnp.dot(M, pre, preferred_element_type=jnp.float32,
                        precision=_HIGHEST)                      # (24, TN)

        # ---- perspective divide on world rows, then grouped aligned stores ----
        inv_w = pl.reciprocal(mixed[3:4, :] + 1e-10, approx=False)
        out_ref[i, 0:8, :] = jnp.concatenate(
            [mixed[0:3, :] * inv_w, mixed[3:8, :]], axis=0)      # xyz | w-pad | rot
        out_ref[i, 8:16, :] = mixed[8:16, :]                     # frest[0:8]
        out_ref[i, 16:24, :] = mixed[16:24, :]                   # frest[8] | opa | scl | fdc


# ------------------------------- tiling choice ---------------------------------
def _choose_tiles(B, N):
    """Pick lane tile TN (<= 16384, divides N) and images-per-step BB so each
    input block is ~<= 1.5 MB; BB capped at 8 (static unroll) and divides B."""
    if N <= 16384:
        tn = N
    else:
        tn = N
        for cand in range(16384, 127, -128):
            if N % cand == 0:
                tn = cand
                break
    bb_cap = max(1, min(8, B, max(1, 16384 // tn)))
    bb = max(d for d in range(1, bb_cap + 1) if B % d == 0)
    return bb, tn


# ------------------------------- wrappers --------------------------------------
def text2splat_decoder_forward_packed(gaussian_splats, source_cameras_view_to_world,
                                      source_cv2wT_quat, cfg=CFG):
    """Runs the splatter head, returning the packed [B, 24, N] f32 slab
    (lane-dense layout; see row-layout comment at top of file)."""
    B, C, H, W = gaussian_splats.shape
    N = H * W
    assert C == C_TOTAL
    assert cfg.model.max_sh_degree == 1, "only SH order 1 implemented"

    splat = gaussian_splats.reshape(B, C, N).astype(jnp.float32)
    ray = init_ray_dirs(cfg).reshape(3, N)                       # cached, [3, N]
    cam = source_cameras_view_to_world.reshape(B, 4, 4).astype(jnp.float32)
    quat = source_cv2wT_quat.reshape(B, 4).astype(jnp.float32)
    mix = _build_mix_matrices(cam, quat)                         # (B, 24, 24)

    BB, TN = _choose_tiles(B, N)
    kernel = functools.partial(_splat_head_kernel, bb=BB,
                               znear=float(cfg.data.znear),
                               zfar=float(cfg.data.zfar))

    # Per-block VMEM: in/out blocks are 24*BB*TN*4 <= ~1.5 MB each (double
    # buffered), well under the default scoped-VMEM limit on v5e/v6e/v7x.
    packed = pl.pallas_call(
        kernel,
        out_shape=jax.ShapeDtypeStruct((B, _ROWS, N), jnp.float32),
        grid=(B // BB, N // TN),
        in_specs=[pl.BlockSpec((BB, _ROWS, _ROWS), lambda b, n: (b, 0, 0)),
                  pl.BlockSpec((BB, C_TOTAL, TN), lambda b, n: (b, 0, n)),
                  pl.BlockSpec((3, TN), lambda b, n: (0, n))],
        out_specs=pl.BlockSpec((BB, _ROWS, TN), lambda b, n: (b, 0, n)),
        compiler_params=pltpu.CompilerParams(
            dimension_semantics=("parallel", "parallel")),
    )(mix, splat, ray)
    return packed


def unpack_splat_outputs(packed, cfg=CFG):
    """Consumer-boundary conversion of the packed slab to the module's output
    dict ([B,N,*] tensors).  ONE transpose; consumers that accept the packed
    [B,24,N] layout should skip this entirely."""
    B, _, N = packed.shape
    p = jnp.transpose(packed, (0, 2, 1))                         # [B, N, 24]
    scaling = p[:, :, 18:21]
    if cfg.model.isotropic:
        scaling = jnp.repeat(p[:, :, 18:19], 3, axis=2)
    return {
        "xyz": p[:, :, 0:3],
        "rotation": p[:, :, 4:8],
        "opacity": p[:, :, 17:18],
        "scaling": scaling,
        "features_dc": p[:, :, 21:24][:, :, None, :],            # [B,N,1,3]
        "features_rest": p[:, :, 8:17].reshape(B, N, SH_NUM, 3), # [B,N,3,3]
    }


def text2splat_decoder_forward(gaussian_splats, source_cameras_view_to_world,
                               source_cv2wT_quat, cfg=CFG):
    """do_decode=False forward of Text2SplatDecoder (N_views = 1)."""
    packed = text2splat_decoder_forward_packed(
        gaussian_splats, source_cameras_view_to_world, source_cv2wT_quat, cfg)
    # multi_view_union with N_views == 1 is the identity; make_contiguous is a no-op.
    return unpack_splat_outputs(packed, cfg)


# --------------------------- pure-JAX reference --------------------------------
def _reference(gaussian_splats, cam_v2w, cv2wT_quat, cfg=CFG):
    B, C, H, W = gaussian_splats.shape
    N = H * W
    depth, offset, opacity, scaling, rotation, fdc, frest = jnp.split(
        gaussian_splats, np.cumsum(SPLIT_DIMS)[:-1].tolist(), axis=1)
    ray = init_ray_dirs(cfg)                                     # [1,3,H,W]
    d = jax.nn.sigmoid(depth) * (cfg.data.zfar - cfg.data.znear) + cfg.data.znear
    pos = ray * d + offset
    flat = lambda t: jnp.transpose(t.reshape(B, t.shape[1], -1), (0, 2, 1))
    pos = flat(pos)
    pos = jnp.concatenate([pos, jnp.ones((B, N, 1), jnp.float32)], axis=2)
    cam = cam_v2w.reshape(B, 4, 4)
    pos = jnp.einsum("bnk,bkc->bnc", pos, cam, precision=_HIGHEST)
    pos = pos[:, :, :3] / (pos[:, :, 3:] + 1e-10)
    rot = rotation / jnp.maximum(
        jnp.linalg.norm(rotation, axis=1, keepdims=True), 1e-12)
    rot = flat(rot)
    q = cv2wT_quat.reshape(B, 1, 4)
    aw, ax, ay, az = q[..., 0], q[..., 1], q[..., 2], q[..., 3]
    bw, bx, by, bz = rot[..., 0], rot[..., 1], rot[..., 2], rot[..., 3]
    rot_out = jnp.stack([aw * bw - ax * bx - ay * by - az * bz,
                         aw * bx + ax * bw + ay * bz - az * by,
                         aw * by - ax * bz + ay * bw + az * bx,
                         aw * bz + ax * by - ay * bx + az * bw], axis=-1)
    fr = flat(frest).reshape(B, N, SH_NUM, 3)
    v_to_sh = jnp.array([[0., 0., -1.], [-1., 0., 0.], [0., 1., 0.]], jnp.float32)
    T = jnp.einsum("ij,bjk,kl->bil", v_to_sh.T, cam[:, :3, :3], v_to_sh,
                   precision=_HIGHEST)
    fr_t = jnp.einsum("bnsr,bsp->bnpr", fr, T, precision=_HIGHEST)
    return {
        "xyz": pos,
        "rotation": rot_out,
        "opacity": flat(jax.nn.sigmoid(opacity)),
        "scaling": flat(jnp.exp(scaling)),
        "features_dc": flat(fdc)[:, :, None, :],
        "features_rest": fr_t,
    }


if __name__ == "__main__":
    key = jax.random.PRNGKey(0)
    k1, k2, k3 = jax.random.split(key, 3)
    B, H, W = 2, CFG.data.training_resolution, CFG.data.training_resolution

    gaussian_splats = jax.random.normal(k1, (B, C_TOTAL, H, W), jnp.float32) * 0.5
    cam_v2w = (jax.random.normal(k2, (B, 1, 4, 4), jnp.float32) * 0.1
               + jnp.eye(4, dtype=jnp.float32)[None, None])
    cv2wT_quat = jax.random.normal(k3, (B, 1, 4), jnp.float32)
    cv2wT_quat = cv2wT_quat / jnp.linalg.norm(cv2wT_quat, axis=-1, keepdims=True)

    out = text2splat_decoder_forward(gaussian_splats, cam_v2w, cv2wT_quat)
    out = jax.tree_util.tree_map(jax.block_until_ready, out)

    ref = _reference(gaussian_splats, cam_v2w, cv2wT_quat)
    for name in ref:
        np.testing.assert_allclose(np.asarray(out[name]), np.asarray(ref[name]),
                                   rtol=3e-4, atol=3e-5)
    print("KERNEL_OK")
</pallas_src>

<mosaic_0001>
module attributes {stable_mosaic.version = 11 : i64} {
  func.func @_splat_head_kernel(%arg0: i32, %arg1: i32, %arg2: memref<2x24x24xf32, #tpu.memory_space<vmem>>, %arg3: memref<2x24x256xf32, #tpu.memory_space<vmem>>, %arg4: memref<3x256xf32, #tpu.memory_space<vmem>>, %arg5: memref<2x24x256xf32, #tpu.memory_space<vmem>>) attributes {dimension_semantics = [#tpu.dimension_semantics<parallel>, #tpu.dimension_semantics<parallel>], iteration_bounds = array<i64: 1, 1>, scalar_prefetch = 0 : i64, scratch_operands = 0 : i64, tpu.core_type = #tpu.core_type<tc>, window_params = [{transform_indices = @transform_0, window_bounds = array<i64: 2, 24, 24>}, {transform_indices = @transform_1, window_bounds = array<i64: 2, 24, 256>}, {transform_indices = @transform_2, window_bounds = array<i64: 3, 256>}, {transform_indices = @transform_3, window_bounds = array<i64: 2, 24, 256>}]} {
    %c0 = arith.constant 0 : index
    %c0_0 = arith.constant 0 : index
    %0 = vector.load %arg4[%c0, %c0_0] : memref<3x256xf32, #tpu.memory_space<vmem>>, vector<3x256xf32>
    %c0_1 = arith.constant 0 : index
    %c0_2 = arith.constant 0 : index
    %c0_3 = arith.constant 0 : index
    %1 = vector.load %arg3[%c0_1, %c0_2, %c0_3] : memref<2x24x256xf32, #tpu.memory_space<vmem>>, vector<1x24x256xf32>
    %2 = vector.shape_cast %1 : vector<1x24x256xf32> to vector<24x256xf32>
    %c0_4 = arith.constant 0 : index
    %c0_5 = arith.constant 0 : index
    %c0_6 = arith.constant 0 : index
    %3 = vector.load %arg2[%c0_4, %c0_5, %c0_6] : memref<2x24x24xf32, #tpu.memory_space<vmem>>, vector<1x24x24xf32>
    %4 = vector.shape_cast %3 : vector<1x24x24xf32> to vector<24x24xf32>
    %5 = vector.extract_strided_slice %2 {offsets = [0, 0], sizes = [1, 256], strides = [1, 1]} : vector<24x256xf32> to vector<1x256xf32>
    %cst = arith.constant 0.000000e+00 : f32
    %6 = vector.broadcast %cst : f32 to vector<1x256xf32>
    %7 = arith.subf %6, %5 : vector<1x256xf32>
    %8 = vector.extract_strided_slice %2 {offsets = [4, 0], sizes = [1, 256], strides = [1, 1]} : vector<24x256xf32> to vector<1x256xf32>
    %cst_7 = arith.constant 0.000000e+00 : f32
    %9 = vector.broadcast %cst_7 : f32 to vector<1x256xf32>
    %10 = arith.subf %9, %8 : vector<1x256xf32>
    %11 = vector.extract_strided_slice %2 {offsets = [5, 0], sizes = [3, 256], strides = [1, 1]} : vector<24x256xf32> to vector<3x256xf32>
    %12 = tpu.concatenate %7, %10, %11 in 0 : vector<1x256xf32>, vector<1x256xf32>, vector<3x256xf32> -> vector<5x256xf32>
    %13 = math.exp %12 : vector<5x256xf32>
    %14 = vector.extract_strided_slice %13 {offsets = [0, 0], sizes = [2, 256], strides = [1, 1]} : vector<5x256xf32> to vector<2x256xf32>
    %cst_8 = arith.constant 1.000000e+00 : f32
    %15 = vector.broadcast %cst_8 : f32 to vector<2x256xf32>
    %16 = arith.addf %15, %14 : vector<2x256xf32>
    %cst_9 = arith.constant 1.000000e+00 : f32
    %17 = vector.broadcast %cst_9 : f32 to vector<2x256xf32>
    %18 = arith.divf %17, %16 : vector<2x256xf32>
    %19 = vector.extract_strided_slice %18 {offsets = [0, 0], sizes = [1, 256], strides = [1, 1]} : vector<2x256xf32> to vector<1x256xf32>
    %cst_10 = arith.constant 2.400000e+00 : f32
    %20 = vector.broadcast %cst_10 : f32 to vector<1x256xf32>
    %21 = arith.mulf %19, %20 : vector<1x256xf32>
    %cst_11 = arith.constant 8.000000e-01 : f32
    %22 = vector.broadcast %cst_11 : f32 to vector<1x256xf32>
    %23 = arith.addf %21, %22 : vector<1x256xf32>
    %24 = vector.broadcast %23 : vector<1x256xf32> to vector<3x256xf32>
    %25 = arith.mulf %0, %24 : vector<3x256xf32>
    %26 = vector.extract_strided_slice %2 {offsets = [1, 0], sizes = [3, 256], strides = [1, 1]} : vector<24x256xf32> to vector<3x256xf32>
    %27 = arith.addf %25, %26 : vector<3x256xf32>
    %cst_12 = arith.constant 1.000000e+00 : f32
    %28 = vector.broadcast %cst_12 : f32 to vector<1x256xf32>
    %29 = vector.extract_strided_slice %2 {offsets = [8, 0], sizes = [4, 256], strides = [1, 1]} : vector<24x256xf32> to vector<4x256xf32>
    %30 = arith.mulf %29, %29 : vector<4x256xf32>
    %cst_13 = arith.constant dense<0.000000e+00> : vector<256xf32>
    %31 = vector.multi_reduction <add>, %30, %cst_13 [0] : vector<4x256xf32> to vector<256xf32>
    %32 = vector.shape_cast %31 : vector<256xf32> to vector<1x256xf32>
    %cst_14 = arith.constant 1.000000e-24 : f32
    %33 = vector.broadcast %cst_14 : f32 to vector<1x256xf32>
    %34 = arith.maximumf %32, %33 : vector<1x256xf32>
    %35 = math.rsqrt %34 : vector<1x256xf32>
    %36 = vector.broadcast %35 : vector<1x256xf32> to vector<4x256xf32>
    %37 = arith.mulf %29, %36 : vector<4x256xf32>
    %38 = vector.extract_strided_slice %18 {offsets = [1, 0], sizes = [1, 256], strides = [1, 1]} : vector<2x256xf32> to vector<1x256xf32>
    %39 = vector.extract_strided_slice %13 {offsets = [2, 0], sizes = [3, 256], strides = [1, 1]} : vector<5x256xf32> to vector<3x256xf32>
    %40 = vector.extract_strided_slice %2 {offsets = [12, 0], sizes = [12, 256], strides = [1, 1]} : vector<24x256xf32> to vector<12x256xf32>
    %41 = tpu.concatenate %27, %28, %38, %39, %37, %40 in 0 : vector<3x256xf32>, vector<1x256xf32>, vector<1x256xf32>, vector<3x256xf32>, vector<4x256xf32>, vector<12x256xf32> -> vector<24x256xf32>
    %cst_15 = arith.constant dense<0.000000e+00> : vector<24x256xf32>
    %42 = tpu.matmul %4, %41, %cst_15 {dimension_numbers = #tpu.dot_dimension_numbers<[1], [0], [0], [1], [0, 0, 1, 1], [], []>, precision = #tpu.contract_precision<fp32>} : vector<24x24xf32>, vector<24x256xf32>, vector<24x256xf32> -> vector<24x256xf32>
    %43 = vector.extract_strided_slice %42 {offsets = [3, 0], sizes = [1, 256], strides = [1, 1]} : vector<24x256xf32> to vector<1x256xf32>
    %cst_16 = arith.constant 1.000000e-10 : f32
    %44 = vector.broadcast %cst_16 : f32 to vector<1x256xf32>
    %45 = arith.addf %43, %44 : vector<1x256xf32>
    %46 = tpu.reciprocal %45 : vector<1x256xf32> -> vector<1x256xf32>
    %47 = vector.extract_strided_slice %42 {offsets = [0, 0], sizes = [3, 256], strides = [1, 1]} : vector<24x256xf32> to vector<3x256xf32>
    %48 = vector.broadcast %46 : vector<1x256xf32> to vector<3x256xf32>
    %49 = arith.mulf %47, %48 : vector<3x256xf32>
    %50 = vector.extract_strided_slice %42 {offsets = [3, 0], sizes = [5, 256], strides = [1, 1]} : vector<24x256xf32> to vector<5x256xf32>
    %51 = tpu.concatenate %49, %50 in 0 : vector<3x256xf32>, vector<5x256xf32> -> vector<8x256xf32>
    %c0_17 = arith.constant 0 : index
    %c0_18 = arith.constant 0 : index
    %c0_19 = arith.constant 0 : index
    %52 = vector.load %arg5[%c0_17, %c0_18, %c0_19] : memref<2x24x256xf32, #tpu.memory_space<vmem>>, vector<1x8x256xf32>
    %53 = vector.shape_cast %52 : vector<1x8x256xf32> to vector<8x256xf32>
    %54 = vector.shape_cast %51 : vector<8x256xf32> to vector<1x8x256xf32>
    tpu.vector_store %arg5[%c0_17, %c0_18, %c0_19], %54 {strides = array<i32>} : memref<2x24x256xf32, #tpu.memory_space<vmem>>, vector<1x8x256xf32>,
    %55 = vector.extract_strided_slice %42 {offsets = [8, 0], sizes = [8, 256], strides = [1, 1]} : vector<24x256xf32> to vector<8x256xf32>
    %c0_20 = arith.constant 0 : index
    %c8 = arith.constant 8 : index
    %c0_21 = arith.constant 0 : index
    %56 = vector.load %arg5[%c0_20, %c8, %c0_21] : memref<2x24x256xf32, #tpu.memory_space<vmem>>, vector<1x8x256xf32>
    %57 = vector.shape_cast %56 : vector<1x8x256xf32> to vector<8x256xf32>
    %58 = vector.shape_cast %55 : vector<8x256xf32> to vector<1x8x256xf32>
    tpu.vector_store %arg5[%c0_20, %c8, %c0_21], %58 {strides = array<i32>} : memref<2x24x256xf32, #tpu.memory_space<vmem>>, vector<1x8x256xf32>,
    %59 = vector.extract_strided_slice %42 {offsets = [16, 0], sizes = [8, 256], strides = [1, 1]} : vector<24x256xf32> to vector<8x256xf32>
    %c0_22 = arith.constant 0 : index
    %c16 = arith.constant 16 : index
    %c0_23 = arith.constant 0 : index
    %60 = vector.load %arg5[%c0_22, %c16, %c0_23] : memref<2x24x256xf32, #tpu.memory_space<vmem>>, vector<1x8x256xf32>
    %61 = vector.shape_cast %60 : vector<1x8x256xf32> to vector<8x256xf32>
    %62 = vector.shape_cast %59 : vector<8x256xf32> to vector<1x8x256xf32>
    tpu.vector_store %arg5[%c0_22, %c16, %c0_23], %62 {strides = array<i32>} : memref<2x24x256xf32, #tpu.memory_space<vmem>>, vector<1x8x256xf32>,
    %c1 = arith.constant 1 : index
    %c0_24 = arith.constant 0 : index
    %c0_25 = arith.constant 0 : index
    %63 = vector.load %arg3[%c1, %c0_24, %c0_25] : memref<2x24x256xf32, #tpu.memory_space<vmem>>, vector<1x24x256xf32>
    %64 = vector.shape_cast %63 : vector<1x24x256xf32> to vector<24x256xf32>
    %c1_26 = arith.constant 1 : index
    %c0_27 = arith.constant 0 : index
    %c0_28 = arith.constant 0 : index
    %65 = vector.load %arg2[%c1_26, %c0_27, %c0_28] : memref<2x24x24xf32, #tpu.memory_space<vmem>>, vector<1x24x24xf32>
    %66 = vector.shape_cast %65 : vector<1x24x24xf32> to vector<24x24xf32>
    %67 = vector.extract_strided_slice %64 {offsets = [0, 0], sizes = [1, 256], strides = [1, 1]} : vector<24x256xf32> to vector<1x256xf32>
    %cst_29 = arith.constant 0.000000e+00 : f32
    %68 = vector.broadcast %cst_29 : f32 to vector<1x256xf32>
    %69 = arith.subf %68, %67 : vector<1x256xf32>
    %70 = vector.extract_strided_slice %64 {offsets = [4, 0], sizes = [1, 256], strides = [1, 1]} : vector<24x256xf32> to vector<1x256xf32>
    %cst_30 = arith.constant 0.000000e+00 : f32
    %71 = vector.broadcast %cst_30 : f32 to vector<1x256xf32>
    %72 = arith.subf %71, %70 : vector<1x256xf32>
    %73 = vector.extract_strided_slice %64 {offsets = [5, 0], sizes = [3, 256], strides = [1, 1]} : vector<24x256xf32> to vector<3x256xf32>
    %74 = tpu.concatenate %69, %72, %73 in 0 : vector<1x256xf32>, vector<1x256xf32>, vector<3x256xf32> -> vector<5x256xf32>
    %75 = math.exp %74 : vector<5x256xf32>
    %76 = vector.extract_strided_slice %75 {offsets = [0, 0], sizes = [2, 256], strides = [1, 1]} : vector<5x256xf32> to vector<2x256xf32>
    %cst_31 = arith.constant 1.000000e+00 : f32
    %77 = vector.broadcast %cst_31 : f32 to vector<2x256xf32>
    %78 = arith.addf %77, %76 : vector<2x256xf32>
    %cst_32 = arith.constant 1.000000e+00 : f32
    %79 = vector.broadcast %cst_32 : f32 to vector<2x256xf32>
    %80 = arith.divf %79, %78 : vector<2x256xf32>
    %81 = vector.extract_strided_slice %80 {offsets = [0, 0], sizes = [1, 256], strides = [1, 1]} : vector<2x256xf32> to vector<1x256xf32>
    %cst_33 = arith.constant 2.400000e+00 : f32
    %82 = vector.broadcast %cst_33 : f32 to vector<1x256xf32>
    %83 = arith.mulf %81, %82 : vector<1x256xf32>
    %cst_34 = arith.constant 8.000000e-01 : f32
    %84 = vector.broadcast %cst_34 : f32 to vector<1x256xf32>
    %85 = arith.addf %83, %84 : vector<1x256xf32>
    %86 = vector.broadcast %85 : vector<1x256xf32> to vector<3x256xf32>
    %87 = arith.mulf %0, %86 : vector<3x256xf32>
    %88 = vector.extract_strided_slice %64 {offsets = [1, 0], sizes = [3, 256], strides = [1, 1]} : vector<24x256xf32> to vector<3x256xf32>
    %89 = arith.addf %87, %88 : vector<3x256xf32>
    %cst_35 = arith.constant 1.000000e+00 : f32
    %90 = vector.broadcast %cst_35 : f32 to vector<1x256xf32>
    %91 = vector.extract_strided_slice %64 {offsets = [8, 0], sizes = [4, 256], strides = [1, 1]} : vector<24x256xf32> to vector<4x256xf32>
    %92 = arith.mulf %91, %91 : vector<4x256xf32>
    %cst_36 = arith.constant dense<0.000000e+00> : vector<256xf32>
    %93 = vector.multi_reduction <add>, %92, %cst_36 [0] : vector<4x256xf32> to vector<256xf32>
    %94 = vector.shape_cast %93 : vector<256xf32> to vector<1x256xf32>
    %cst_37 = arith.constant 1.000000e-24 : f32
    %95 = vector.broadcast %cst_37 : f32 to vector<1x256xf32>
    %96 = arith.maximumf %94, %95 : vector<1x256xf32>
    %97 = math.rsqrt %96 : vector<1x256xf32>
    %98 = vector.broadcast %97 : vector<1x256xf32> to vector<4x256xf32>
    %99 = arith.mulf %91, %98 : vector<4x256xf32>
    %100 = vector.extract_strided_slice %80 {offsets = [1, 0], sizes = [1, 256], strides = [1, 1]} : vector<2x256xf32> to vector<1x256xf32>
    %101 = vector.extract_strided_slice %75 {offsets = [2, 0], sizes = [3, 256], strides = [1, 1]} : vector<5x256xf32> to vector<3x256xf32>
    %102 = vector.extract_strided_slice %64 {offsets = [12, 0], sizes = [12, 256], strides = [1, 1]} : vector<24x256xf32> to vector<12x256xf32>
    %103 = tpu.concatenate %89, %90, %100, %101, %99, %102 in 0 : vector<3x256xf32>, vector<1x256xf32>, vector<1x256xf32>, vector<3x256xf32>, vector<4x256xf32>, vector<12x256xf32> -> vector<24x256xf32>
    %cst_38 = arith.constant dense<0.000000e+00> : vector<24x256xf32>
    %104 = tpu.matmul %66, %103, %cst_38 {dimension_numbers = #tpu.dot_dimension_numbers<[1], [0], [0], [1], [0, 0, 1, 1], [], []>, precision = #tpu.contract_precision<fp32>} : vector<24x24xf32>, vector<24x256xf32>, vector<24x256xf32> -> vector<24x256xf32>
    %105 = vector.extract_strided_slice %104 {offsets = [3, 0], sizes = [1, 256], strides = [1, 1]} : vector<24x256xf32> to vector<1x256xf32>
    %cst_39 = arith.constant 1.000000e-10 : f32
    %106 = vector.broadcast %cst_39 : f32 to vector<1x256xf32>
    %107 = arith.addf %105, %106 : vector<1x256xf32>
    %108 = tpu.reciprocal %107 : vector<1x256xf32> -> vector<1x256xf32>
    %109 = vector.extract_strided_slice %104 {offsets = [0, 0], sizes = [3, 256], strides = [1, 1]} : vector<24x256xf32> to vector<3x256xf32>
    %110 = vector.broadcast %108 : vector<1x256xf32> to vector<3x256xf32>
    %111 = arith.mulf %109, %110 : vector<3x256xf32>
    %112 = vector.extract_strided_slice %104 {offsets = [3, 0], sizes = [5, 256], strides = [1, 1]} : vector<24x256xf32> to vector<5x256xf32>
    %113 = tpu.concatenate %111, %112 in 0 : vector<3x256xf32>, vector<5x256xf32> -> vector<8x256xf32>
    %c1_40 = arith.constant 1 : index
    %c0_41 = arith.constant 0 : index
    %c0_42 = arith.constant 0 : index
    %114 = vector.load %arg5[%c1_40, %c0_41, %c0_42] : memref<2x24x256xf32, #tpu.memory_space<vmem>>, vector<1x8x256xf32>
    %115 = vector.shape_cast %114 : vector<1x8x256xf32> to vector<8x256xf32>
    %116 = vector.shape_cast %113 : vector<8x256xf32> to vector<1x8x256xf32>
    tpu.vector_store %arg5[%c1_40, %c0_41, %c0_42], %116 {strides = array<i32>} : memref<2x24x256xf32, #tpu.memory_space<vmem>>, vector<1x8x256xf32>,
    %117 = vector.extract_strided_slice %104 {offsets = [8, 0], sizes = [8, 256], strides = [1, 1]} : vector<24x256xf32> to vector<8x256xf32>
    %c1_43 = arith.constant 1 : index
    %c8_44 = arith.constant 8 : index
    %c0_45 = arith.constant 0 : index
    %118 = vector.load %arg5[%c1_43, %c8_44, %c0_45] : memref<2x24x256xf32, #tpu.memory_space<vmem>>, vector<1x8x256xf32>
    %119 = vector.shape_cast %118 : vector<1x8x256xf32> to vector<8x256xf32>
    %120 = vector.shape_cast %117 : vector<8x256xf32> to vector<1x8x256xf32>
    tpu.vector_store %arg5[%c1_43, %c8_44, %c0_45], %120 {strides = array<i32>} : memref<2x24x256xf32, #tpu.memory_space<vmem>>, vector<1x8x256xf32>,
    %121 = vector.extract_strided_slice %104 {offsets = [16, 0], sizes = [8, 256], strides = [1, 1]} : vector<24x256xf32> to vector<8x256xf32>
    %c1_46 = arith.constant 1 : index
    %c16_47 = arith.constant 16 : index
    %c0_48 = arith.constant 0 : index
    %122 = vector.load %arg5[%c1_46, %c16_47, %c0_48] : memref<2x24x256xf32, #tpu.memory_space<vmem>>, vector<1x8x256xf32>
    %123 = vector.shape_cast %122 : vector<1x8x256xf32> to vector<8x256xf32>
    %124 = vector.shape_cast %121 : vector<8x256xf32> to vector<1x8x256xf32>
    tpu.vector_store %arg5[%c1_46, %c16_47, %c0_48], %124 {strides = array<i32>} : memref<2x24x256xf32, #tpu.memory_space<vmem>>, vector<1x8x256xf32>,
    return
  }
  func.func @transform_0(%arg0: i32, %arg1: i32) -> (i32, i32, i32) {
    %c0_i32 = arith.constant 0 : i32
    %c0_i32_0 = arith.constant 0 : i32
    %c0_i32_1 = arith.constant 0 : i32
    return %arg0, %c0_i32, %c0_i32_0 : i32, i32, i32
  }
  func.func @transform_1(%arg0: i32, %arg1: i32) -> (i32, i32, i32) {
    %c0_i32 = arith.constant 0 : i32
    %c0_i32_0 = arith.constant 0 : i32
    return %arg0, %c0_i32, %arg1 : i32, i32, i32
  }
  func.func @transform_2(%arg0: i32, %arg1: i32) -> (i32, i32) {
    %c0_i32 = arith.constant 0 : i32
    %c0_i32_0 = arith.constant 0 : i32
    return %c0_i32, %arg1 : i32, i32
  }
  func.func @transform_3(%arg0: i32, %arg1: i32) -> (i32, i32, i32) {
    %c0_i32 = arith.constant 0 : i32
    %c0_i32_0 = arith.constant 0 : i32
    return %arg0, %c0_i32, %arg1 : i32, i32, i32
  }
}

</mosaic_0001>

<llo_original>
// kernel: tpu_custom_call.1
$region0: #{tpu_custom_call.1}
  #allocation0 [shape = 'u32[]', space=smem, size = 0x4, offset = 0x4, fixed_abs, tag = 'smem constant byte address 0x4 - core index']
  #allocation1 [shape = 'u32[144,128]{1,0:T(1,128)}', space=vmem, size = 0x12000, scoped, tag = 'internal scratch']
  %s0 = inlined_call_operand.hbm [shape: f32[2,24,24], index: 0, kind: input, shape index: {}]
  %s1 = inlined_call_operand.hbm [shape: f32[2,24,256], index: 1, kind: input, shape index: {}]
  %s2 = inlined_call_operand.hbm [shape: f32[3,256], index: 2, kind: input, shape index: {}]
  %s3 = inlined_call_operand.hbm [shape: f32[2,24,256], index: 3, kind: output, shape index: {}]
  %s4 = sld [smem:[#allocation0]]
  $region34: #{tpu_custom_call.1} parent=0
    _
  %s6 = ssub.s32 1, %s4
  %s7 = scalar_select 0, %s6, %s4
  $region1: #{tpu_custom_call.1} parent=0
    #allocation2 [shape = 'u8[24576]{0}', space=vmem, size = 0x6000, scoped, tag = 'input window, operand 0, single buffered']
    #allocation3 [shape = 's32[1]{0}', space=sflag, size = 0x4, scoped, tag = 'scoped memory for tpu_custom_call.1']
    #allocation4 [shape = 's32[1]{0}', space=sflag, size = 0x4, scoped, tag = 'scoped memory for tpu_custom_call.1']
    #allocation5 [shape = 'u8[49152]{0}', space=vmem, size = 0xc000, scoped, tag = 'input window, operand 1, single buffered']
    #allocation6 [shape = 's32[1]{0}', space=sflag, size = 0x4, scoped, tag = 'scoped memory for tpu_custom_call.1']
    #allocation7 [shape = 'u8[4096]{0}', space=vmem, size = 0x1000, scoped, tag = 'input window, operand 2, single buffered']
    #allocation8 [shape = 'u8[49152]{0}', space=vmem, size = 0xc000, scoped, tag = 'output window, operand 0, single buffered']
    %8 = vsyncpa [#allocation3], 0
    %9 = vsyncpa [#allocation6], 0
    %10 = vsyncpa [#allocation4], 0
    // Predicated region
    $region2: #{tpu_custom_call.1} parent=1 // pred_check
      _
    $region3: #{tpu_custom_call.1} parent=1 // pred_check_branch
      %12 = sbr.rel (0) target = $region5
    $region4: #{tpu_custom_call.1} parent=1 // pred_region
      %s14 = ssub.s32 768, 768
      %15 = vsyncadd [#allocation3], %s14
      %s16 = sshll.u32 [#allocation2], 4
      %s17 = int_to_ptr.vmem [resolvable:$true] %s16
      %22 = dma.hbm_to_vmem [thread:$0]  %s0, 768, %s17, [#allocation3], 128, 128, 8
    $region5: #{tpu_custom_call.1} parent=1 // pred_fallthru
      _
    // Predicated region
    $region6: #{tpu_custom_call.1} parent=1 // pred_check
      _
    $region7: #{tpu_custom_call.1} parent=1 // pred_check_branch
      %24 = sbr.rel (0) target = $region9
    $region8: #{tpu_custom_call.1} parent=1 // pred_region
      %s26 = ssub.s32 1536, 1536
      %27 = vsyncadd [#allocation6], %s26
      %s28 = sshll.u32 [#allocation5], 4
      %s29 = int_to_ptr.vmem [resolvable:$true] %s28
      %34 = dma.hbm_to_vmem [thread:$0]  %s1, 1536, %s29, [#allocation6], 256, 256, 16
    $region9: #{tpu_custom_call.1} parent=1 // pred_fallthru
      _
    // Predicated region
    $region10: #{tpu_custom_call.1} parent=1 // pred_check
      _
    $region11: #{tpu_custom_call.1} parent=1 // pred_check_branch
      %36 = sbr.rel (0) target = $region13
    $region12: #{tpu_custom_call.1} parent=1 // pred_region
      %s38 = ssub.s32 128, 128
      %39 = vsyncadd [#allocation6], %s38
      %s41 = sshll.u32 [#allocation7], 4
      %s42 = int_to_ptr.vmem [resolvable:$true] %s41
      %44 = dma.hbm_to_vmem [thread:$0]  %s2, 128, %s42, [#allocation6]
    $region13: #{tpu_custom_call.1} parent=1 // pred_fallthru
      _
    // Predicated region
    $region14: #{tpu_custom_call.1} parent=1 // pred_check
      _
    $region15: #{tpu_custom_call.1} parent=1 // pred_check_branch
      %46 = sbr.rel (0) target = $region17
    $region16: #{tpu_custom_call.1} parent=1 // pred_region
      %47 = dma.done [#allocation3], 768
    $region17: #{tpu_custom_call.1} parent=1 // pred_fallthru
      _
    // Predicated region
    $region18: #{tpu_custom_call.1} parent=1 // pred_check
      _
    $region19: #{tpu_custom_call.1} parent=1 // pred_check_branch
      %49 = sbr.rel (0) target = $region21
    $region20: #{tpu_custom_call.1} parent=1 // pred_region
      %50 = dma.done [#allocation6], 1536
    $region21: #{tpu_custom_call.1} parent=1 // pred_fallthru
      _
    // Predicated region
    $region22: #{tpu_custom_call.1} parent=1 // pred_check
      _
    $region23: #{tpu_custom_call.1} parent=1 // pred_check_branch
      %52 = sbr.rel (0) target = $region25
    $region24: #{tpu_custom_call.1} parent=1 // pred_region
      %53 = dma.done [#allocation6], 128
    $region25: #{tpu_custom_call.1} parent=1 // pred_fallthru
      _
    %v54 = vld [vmem:[#allocation7] sm:$0x77]
    %v55 = vld [vmem:[#allocation5] sm:$0xff]
    %v56 = vld [vmem:[#allocation5 + $0x8] sm:$0xff]
    %v57 = vld [vmem:[#allocation5 + $0x10] sm:$0xff]
    %v58 = vld [vmem:[#allocation5 + $0x18] sm:$0xff]
    %v59 = vld [vmem:[#allocation5 + $0x20] sm:$0xff]
    %v60 = vld [vmem:[#allocation5 + $0x28] sm:$0xff]
    %v61 = vld [vmem:[#allocation2] sm:$0xff]
    %v62 = vld [vmem:[#allocation2 + $0x8] sm:$0xff]
    %v63 = vld [vmem:[#allocation2 + $0x10] sm:$0xff]
    %v64 = vsub.f32 0.0, %v55
    %v65 = vsub.f32 0.0, %v56
    %v68 = vrot.slane %v64, 3
    %v69 = vrot.slane %v65, 3
    %v74 = vrot.slane %v55, 3
    %v75 = vrot.slane %v56, 3
    %vm78 = vcmask 1040384
    %v79 = vsel %vm78, %v64, %v68
    %v80 = vsel %vm78, %v65, %v69
    %vm81 = vcmask 1041408
    %v82 = vsel %vm81, %v79, %v74
    %v83 = vsel %vm81, %v80, %v75
    %v84 = vmul.f32 %v82, 1.442695
    %v85 = vpow.pop %v84
    %v86 = vmul.f32 %v83, 1.442695
    %v87 = vpow.pop %v86
    %v88 = vadd.f32 %v85, 1.0
    %v89 = vadd.f32 %v87, 1.0
    %v90 = vrcp.pop %v88
    %v91 = vmul.f32 1.0, %v90
    %v92 = vrcp.pop %v89
    %v93 = vmul.f32 1.0, %v92
    %v94 = vmul.f32 %v91, 2.4
    %v95 = vmul.f32 %v93, 2.4
    %v96 = vadd.f32 %v94, 0.8
    %v97 = vadd.f32 %v95, 0.8
    %v98 = vlaneseq
    %v99 = vshrl.u32 %v98, 7
    %v100 = vsub.s32 0, %v99
    %v101 = vrot.slane %v96, %v100
    %v102 = vlaneseq
    %v103 = vshrl.u32 %v102, 7
    %v104 = vsub.s32 0, %v103
    %v105 = vrot.slane %v97, %v104
    %v108 = vcombine.low %v101, %v105
    %v110 = vmul.f32 %v54, %v108
    %v111 = vcombine.low %v55, %v56
    %v112 = vrot.slane %v111, 5
    %v113 = vrot.slane %v112, 4
    %v115 = vadd.f32 %v110, %v113
    %v116 = vmul.f32 %v57, %v57
    %v117 = vmul.f32 %v58, %v58
    %vm118 = vcmask 1043456
    %v119 = vsel %vm118, %v116, 0.0
    %v120 = vrot.slane %v119, 4
    %v121 = vadd.f32 %v119, %v120
    %v122 = vrot.slane %v121, 2
    %v123 = vadd.f32 %v121, %v122
    %v124 = vrot.slane %v123, 1
    %v125 = vadd.f32 %v123, %v124
    %v126 = vsel %vm118, %v117, 0.0
    %v127 = vrot.slane %v126, 4
    %v128 = vadd.f32 %v126, %v127
    %v129 = vrot.slane %v128, 2
    %v130 = vadd.f32 %v128, %v129
    %v131 = vrot.slane %v130, 1
    %v132 = vadd.f32 %v130, %v131
    %v133 = vmax.f32 %v125, 1e-24
    %v134 = vmax.f32 %v132, 1e-24
    %v135 = vrsqrt.pop %v133
    %v136 = vrsqrt.pop %v134
    %v137 = vmul.f32 %v57, %v135
    %v138 = vmul.f32 %v58, %v136
    %v140 = vcombine.high %v115, %v115
    %v144 = vrot.slane %v91, 5
    %v145 = vrot.slane %v93, 5
    %v150 = vrot.slane %v85, 5
    %v151 = vrot.slane %v87, 5
    %vm154 = vcmask 1042432
    %v155 = vsel %vm154, %v115, 1.0
    %v156 = vsel %vm154, %v140, 1.0
    %v157 = vsel %vm118, %v155, %v144
    %v158 = vsel %vm118, %v156, %v145
    %vm159 = vcmask 1044480
    %v160 = vsel %vm159, %v157, %v150
    %v161 = vsel %vm159, %v158, %v151
    %v162 = vsel %vm118, %v137, %v57
    %v163 = vsel %vm118, %v138, %v58
    %vm164 = vcmask 195584
    %v166 = vsel %vm164, %v61, 0
    %v169 = vsel %vm164, %v62, 0
    %v172 = vsel %vm164, %v63, 0
    %v174 = vand.u32 %v161, 4294901760
    %175 = vmatprep.subr.mxu0 %v174
    %v176 = vand.u32 %v160, 4294901760
    %177 = vmatpush1.msra.mxu0 %v176
    %v178 = vand.u32 %v163, 4294901760
    %179 = vmatprep.subr.mxu0 %v178
    %v180 = vand.u32 %v162, 4294901760
    %181 = vmatpush1.msra.mxu0 %v180
    %v182 = vand.u32 %v60, 4294901760
    %183 = vmatprep.subr.mxu0 %v182
    %v184 = vand.u32 %v59, 4294901760
    %185 = vmatpush1.msra.mxu0 %v184
    %186 = vmatprep.subr.mxu0 0.0
    %187 = vmatpush1.msra.mxu0 0.0
    %188 = vmatprep.subr.mxu0 0.0
    %189 = vmatpush1.msra.mxu0 0.0
    %190 = vmatprep.subr.mxu0 0.0
    %191 = vmatpush1.msra.mxu0 0.0
    %192 = vmatprep.subr.mxu0 0.0
    %193 = vmatpush1.msra.mxu0 0.0
    %194 = vmatprep.subr.mxu0 0.0
    %195 = vmatpush1.msra.mxu0 0.0
    %196 = vmatprep.subr.mxu0 0.0
    %197 = vmatpush1.msra.mxu0 0.0
    %198 = vmatprep.subr.mxu0 0.0
    %199 = vmatpush1.msra.mxu0 0.0
    %200 = vmatprep.subr.mxu0 0.0
    %201 = vmatpush1.msra.mxu0 0.0
    %202 = vmatprep.subr.mxu0 0.0
    %203 = vmatpush1.msra.mxu0 0.0
    %204 = vmatprep.subr.mxu0 0.0
    %205 = vmatpush1.msra.mxu0 0.0
    %206 = vmatprep.subr.mxu0 0.0
    %207 = vmatpush1.msra.mxu0 0.0
    %208 = vmatprep.subr.mxu0 0.0
    %209 = vmatpush1.msra.mxu0 0.0
    %210 = vmatprep.subr.mxu0 0.0
    %211 = vmatpush1.msra.mxu0 0.0
    %212 = vmatprep.subr.mxu0 0.0
    %213 = vmatpush1.msra.mxu0 0.0
    %214 = vmatprep.subr.mxu0 0.0
    %215 = vmatpush1.msra.mxu0 0.0
    %216 = vmatprep.subr.mxu0 0.0
    %217 = vmatpush1.msra.mxu0 0.0
    %218 = vmatprep.subr.mxu0 0.0
    %219 = vmatpush1.msra.mxu0 0.0
    %220 = vmatprep.subr.mxu0 0.0
    %221 = vmatpush1.msra.mxu0 0.0
    %222 = vmatprep.subr.mxu0 0.0
    %223 = vmatpush1.msra.mxu0 0.0
    %224 = vmatprep.subr.mxu0 0.0
    %225 = vmatpush1.msra.mxu0 0.0
    %226 = vmatprep.subr.mxu0 0.0
    %227 = vmatpush1.msra.mxu0 0.0
    %228 = vmatprep.subr.mxu0 0.0
    %229 = vmatpush1.msra.mxu0 0.0
    %230 = vmatprep.subr.mxu0 0.0
    %231 = vmatpush1.msra.mxu0 0.0
    %232 = vmatprep.subr.mxu0 0.0
    %233 = vmatpush1.msra.mxu0 0.0
    %234 = vmatprep.subr.mxu0 0.0
    %235 = vmatpush1.msra.mxu0 0.0
    %236 = vmatprep.subr.mxu0 0.0
    %237 = vmatpush1.msra.mxu0 0.0
    %238 = vmatprep.subr.mxu0 0.0
    %239 = vmatpush1.msra.mxu0 0.0
    %240 = vmatprep.subr.mxu0 0.0
    %241 = vmatpush1.msra.mxu0 0.0
    %242 = vmatprep.subr.mxu0 0.0
    %243 = vmatpush1.msra.mxu0 0.0
    %244 = vmatprep.mubr.f32.mxu0 0.0
    %v245 = vand.u32 %v166, 4294901760
    %v246 = vsub.f32 %v166, %v245
    %v247 = vand.u32 %v246, 4294901760
    %v248 = vsub.f32 %v246, %v247
    %v249 = vand.u32 %v248, 4294901760
    %250 = vmatmul.mubr.f32.gmra.mrb[0].mxu0 %v249
    %v251 = vpop.f32.mrb[0].mxu0
    %v252 = vadd.f32 0.0, %v251
    %v253 = vpop.f32.mrb[0].mxu0
    %v254 = vadd.f32 0.0, %v253
    %255 = vmatprep.mubr.f32.mxu0 0.0
    %v256 = vand.u32 %v169, 4294901760
    %v257 = vsub.f32 %v169, %v256
    %v258 = vand.u32 %v257, 4294901760
    %v259 = vsub.f32 %v257, %v258
    %v260 = vand.u32 %v259, 4294901760
    %261 = vmatmul.mubr.f32.gmra.mrb[0].mxu0 %v260
    %v262 = vpop.f32.mrb[0].mxu0
    %v263 = vadd.f32 0.0, %v262
    %v264 = vpop.f32.mrb[0].mxu0
    %v265 = vadd.f32 0.0, %v264
    %266 = vmatprep.mubr.f32.mxu0 0.0
    %v267 = vand.u32 %v172, 4294901760
    %v268 = vsub.f32 %v172, %v267
    %v269 = vand.u32 %v268, 4294901760
    %v270 = vsub.f32 %v268, %v269
    %v271 = vand.u32 %v270, 4294901760
    %272 = vmatmul.mubr.f32.gmra.mrb[0].mxu0 %v271
    %v273 = vpop.f32.mrb[0].mxu0
    %v274 = vadd.f32 0.0, %v273
    %v275 = vpop.f32.mrb[0].mxu0
    %v276 = vadd.f32 0.0, %v275
    %277 = vdwg.mxu0
    %v278 = vand.u32 %v161, 4294901760
    %v279 = vsub.f32 %v161, %v278
    %v280 = vand.u32 %v279, 4294901760
    %v281 = vsub.f32 %v279, %v280
    %v282 = vand.u32 %v281, 4294901760
    %283 = vmatprep.subr.mxu0 %v282
    %v284 = vand.u32 %v160, 4294901760
    %v285 = vsub.f32 %v160, %v284
    %v286 = vand.u32 %v285, 4294901760
    %v287 = vsub.f32 %v285, %v286
    %v288 = vand.u32 %v287, 4294901760
    %289 = vmatpush1.msra.mxu0 %v288
    %v290 = vand.u32 %v163, 4294901760
    %v291 = vsub.f32 %v163, %v290
    %v292 = vand.u32 %v291, 4294901760
    %v293 = vsub.f32 %v291, %v292
    %v294 = vand.u32 %v293, 4294901760
    %295 = vmatprep.subr.mxu0 %v294
    %v296 = vand.u32 %v162, 4294901760
    %v297 = vsub.f32 %v162, %v296
    %v298 = vand.u32 %v297, 4294901760
    %v299 = vsub.f32 %v297, %v298
    %v300 = vand.u32 %v299, 4294901760
    %301 = vmatpush1.msra.mxu0 %v300
    %v302 = vand.u32 %v60, 4294901760
    %v303 = vsub.f32 %v60, %v302
    %v304 = vand.u32 %v303, 4294901760
    %v305 = vsub.f32 %v303, %v304
    %v306 = vand.u32 %v305, 4294901760
    %307 = vmatprep.subr.mxu0 %v306
    %v308 = vand.u32 %v59, 4294901760
    %v309 = vsub.f32 %v59, %v308
    %v310 = vand.u32 %v309, 4294901760
    %v311 = vsub.f32 %v309, %v310
    %v312 = vand.u32 %v311, 4294901760
    %313 = vmatpush1.msra.mxu0 %v312
    %314 = vmatprep.subr.mxu0 0.0
    %315 = vmatpush1.msra.mxu0 0.0
    %316 = vmatprep.subr.mxu0 0.0
    %317 = vmatpush1.msra.mxu0 0.0
    %318 = vmatprep.subr.mxu0 0.0
    %319 = vmatpush1.msra.mxu0 0.0
    %320 = vmatprep.subr.mxu0 0.0
    %321 = vmatpush1.msra.mxu0 0.0
    %322 = vmatprep.subr.mxu0 0.0
    %323 = vmatpush1.msra.mxu0 0.0
    %324 = vmatprep.subr.mxu0 0.0
    %325 = vmatpush1.msra.mxu0 0.0
    %326 = vmatprep.subr.mxu0 0.0
    %327 = vmatpush1.msra.mxu0 0.0
    %328 = vmatprep.subr.mxu0 0.0
    %329 = vmatpush1.msra.mxu0 0.0
    %330 = vmatprep.subr.mxu0 0.0
    %331 = vmatpush1.msra.mxu0 0.0
    %332 = vmatprep.subr.mxu0 0.0
    %333 = vmatpush1.msra.mxu0 0.0
    %334 = vmatprep.subr.mxu0 0.0
    %335 = vmatpush1.msra.mxu0 0.0
    %336 = vmatprep.subr.mxu0 0.0
    %337 = vmatpush1.msra.mxu0 0.0
    %338 = vmatprep.subr.mxu0 0.0
    %339 = vmatpush1.msra.mxu0 0.0
    %340 = vmatprep.subr.mxu0 0.0
    %341 = vmatpush1.msra.mxu0 0.0
    %342 = vmatprep.subr.mxu0 0.0
    %343 = vmatpush1.msra.mxu0 0.0
    %344 = vmatprep.subr.mxu0 0.0
    %345 = vmatpush1.msra.mxu0 0.0
    %346 = vmatprep.subr.mxu0 0.0
    %347 = vmatpush1.msra.mxu0 0.0
    %348 = vmatprep.subr.mxu0 0.0
    %349 = vmatpush1.msra.mxu0 0.0
    %350 = vmatprep.subr.mxu0 0.0
    %351 = vmatpush1.msra.mxu0 0.0
    %352 = vmatprep.subr.mxu0 0.0
    %353 = vmatpush1.msra.mxu0 0.0
    %354 = vmatprep.subr.mxu0 0.0
    %355 = vmatpush1.msra.mxu0 0.0
    %356 = vmatprep.subr.mxu0 0.0
    %357 = vmatpush1.msra.mxu0 0.0
    %358 = vmatprep.subr.mxu0 0.0
    %359 = vmatpush1.msra.mxu0 0.0
    %360 = vmatprep.subr.mxu0 0.0
    %361 = vmatpush1.msra.mxu0 0.0
    %362 = vmatprep.subr.mxu0 0.0
    %363 = vmatpush1.msra.mxu0 0.0
    %364 = vmatprep.subr.mxu0 0.0
    %365 = vmatpush1.msra.mxu0 0.0
    %366 = vmatprep.subr.mxu0 0.0
    %367 = vmatpush1.msra.mxu0 0.0
    %368 = vmatprep.subr.mxu0 0.0
    %369 = vmatpush1.msra.mxu0 0.0
    %370 = vmatprep.subr.mxu0 0.0
    %371 = vmatpush1.msra.mxu0 0.0
    %372 = vmatprep.mubr.f32.mxu0 0.0
    %v373 = vand.u32 %v166, 4294901760
    %374 = vmatmul.mubr.f32.gmra.mrb[0].mxu0 %v373
    %v375 = vpop.f32.mrb[0].mxu0
    %v376 = vadd.f32 %v252, %v375
    %v377 = vpop.f32.mrb[0].mxu0
    %v378 = vadd.f32 %v254, %v377
    %379 = vmatprep.mubr.f32.mxu0 0.0
    %v380 = vand.u32 %v169, 4294901760
    %381 = vmatmul.mubr.f32.gmra.mrb[0].mxu0 %v380
    %v382 = vpop.f32.mrb[0].mxu0
    %v383 = vadd.f32 %v263, %v382
    %v384 = vpop.f32.mrb[0].mxu0
    %v385 = vadd.f32 %v265, %v384
    %386 = vmatprep.mubr.f32.mxu0 0.0
    %v387 = vand.u32 %v172, 4294901760
    %388 = vmatmul.mubr.f32.gmra.mrb[0].mxu0 %v387
    %v389 = vpop.f32.mrb[0].mxu0
    %v390 = vadd.f32 %v274, %v389
    %v391 = vpop.f32.mrb[0].mxu0
    %v392 = vadd.f32 %v276, %v391
    %393 = vdwg.mxu0
    %v394 = vand.u32 %v161, 4294901760
    %v395 = vsub.f32 %v161, %v394
    %396 = vmatprep.subr.mxu0 %v395
    %v397 = vand.u32 %v160, 4294901760
    %v398 = vsub.f32 %v160, %v397
    %399 = vmatpush1.msra.mxu0 %v398
    %v400 = vand.u32 %v163, 4294901760
    %v401 = vsub.f32 %v163, %v400
    %402 = vmatprep.subr.mxu0 %v401
    %v403 = vand.u32 %v162, 4294901760
    %v404 = vsub.f32 %v162, %v403
    %405 = vmatpush1.msra.mxu0 %v404
    %v406 = vand.u32 %v60, 4294901760
    %v407 = vsub.f32 %v60, %v406
    %408 = vmatprep.subr.mxu0 %v407
    %v409 = vand.u32 %v59, 4294901760
    %v410 = vsub.f32 %v59, %v409
    %411 = vmatpush1.msra.mxu0 %v410
    %412 = vmatprep.subr.mxu0 0.0
    %413 = vmatpush1.msra.mxu0 0.0
    %414 = vmatprep.subr.mxu0 0.0
    %415 = vmatpush1.msra.mxu0 0.0
    %416 = vmatprep.subr.mxu0 0.0
    %417 = vmatpush1.msra.mxu0 0.0
    %418 = vmatprep.subr.mxu0 0.0
    %419 = vmatpush1.msra.mxu0 0.0
    %420 = vmatprep.subr.mxu0 0.0
    %421 = vmatpush1.msra.mxu0 0.0
    %422 = vmatprep.subr.mxu0 0.0
    %423 = vmatpush1.msra.mxu0 0.0
    %424 = vmatprep.subr.mxu0 0.0
    %425 = vmatpush1.msra.mxu0 0.0
    %426 = vmatprep.subr.mxu0 0.0
    %427 = vmatpush1.msra.mxu0 0.0
    %428 = vmatprep.subr.mxu0 0.0
    %429 = vmatpush1.msra.mxu0 0.0
    %430 = vmatprep.subr.mxu0 0.0
    %431 = vmatpush1.msra.mxu0 0.0
    %432 = vmatprep.subr.mxu0 0.0
    %433 = vmatpush1.msra.mxu0 0.0
    %434 = vmatprep.subr.mxu0 0.0
    %435 = vmatpush1.msra.mxu0 0.0
    %436 = vmatprep.subr.mxu0 0.0
    %437 = vmatpush1.msra.mxu0 0.0
    %438 = vmatprep.subr.mxu0 0.0
    %439 = vmatpush1.msra.mxu0 0.0
    %440 = vmatprep.subr.mxu0 0.0
    %441 = vmatpush1.msra.mxu0 0.0
    %442 = vmatprep.subr.mxu0 0.0
    %443 = vmatpush1.msra.mxu0 0.0
    %444 = vmatprep.subr.mxu0 0.0
    %445 = vmatpush1.msra.mxu0 0.0
    %446 = vmatprep.subr.mxu0 0.0
    %447 = vmatpush1.msra.mxu0 0.0
    %448 = vmatprep.subr.mxu0 0.0
    %449 = vmatpush1.msra.mxu0 0.0
    %450 = vmatprep.subr.mxu0 0.0
    %451 = vmatpush1.msra.mxu0 0.0
    %452 = vmatprep.subr.mxu0 0.0
    %453 = vmatpush1.msra.mxu0 0.0
    %454 = vmatprep.subr.mxu0 0.0
    %455 = vmatpush1.msra.mxu0 0.0
    %456 = vmatprep.subr.mxu0 0.0
    %457 = vmatpush1.msra.mxu0 0.0
    %458 = vmatprep.subr.mxu0 0.0
    %459 = vmatpush1.msra.mxu0 0.0
    %460 = vmatprep.subr.mxu0 0.0
    %461 = vmatpush1.msra.mxu0 0.0
    %462 = vmatprep.subr.mxu0 0.0
    %463 = vmatpush1.msra.mxu0 0.0
    %464 = vmatprep.subr.mxu0 0.0
    %465 = vmatpush1.msra.mxu0 0.0
    %466 = vmatprep.subr.mxu0 0.0
    %467 = vmatpush1.msra.mxu0 0.0
    %468 = vmatprep.subr.mxu0 0.0
    %469 = vmatpush1.msra.mxu0 0.0
    %470 = vmatprep.mubr.f32.mxu0 0.0
    %v471 = vand.u32 %v166, 4294901760
    %v472 = vsub.f32 %v166, %v471
    %473 = vmatmul.mubr.f32.gmra.mrb[0].mxu0 %v472
    %v474 = vpop.f32.mrb[0].mxu0
    %v475 = vadd.f32 %v376, %v474
    %v476 = vpop.f32.mrb[0].mxu0
    %v477 = vadd.f32 %v378, %v476
    %478 = vmatprep.mubr.f32.mxu0 0.0
    %v479 = vand.u32 %v169, 4294901760
    %v480 = vsub.f32 %v169, %v479
    %481 = vmatmul.mubr.f32.gmra.mrb[0].mxu0 %v480
    %v482 = vpop.f32.mrb[0].mxu0
    %v483 = vadd.f32 %v383, %v482
    %v484 = vpop.f32.mrb[0].mxu0
    %v485 = vadd.f32 %v385, %v484
    %486 = vmatprep.mubr.f32.mxu0 0.0
    %v487 = vand.u32 %v172, 4294901760
    %v488 = vsub.f32 %v172, %v487
    %489 = vmatmul.mubr.f32.gmra.mrb[0].mxu0 %v488
    %v490 = vpop.f32.mrb[0].mxu0
    %v491 = vadd.f32 %v390, %v490
    %v492 = vpop.f32.mrb[0].mxu0
    %v493 = vadd.f32 %v392, %v492
    %494 = vdwg.mxu0
    %v495 = vand.u32 %v161, 4294901760
    %496 = vmatprep.subr.mxu0 %v495
    %v497 = vand.u32 %v160, 4294901760
    %498 = vmatpush1.msra.mxu0 %v497
    %v499 = vand.u32 %v163, 4294901760
    %500 = vmatprep.subr.mxu0 %v499
    %v501 = vand.u32 %v162, 4294901760
    %502 = vmatpush1.msra.mxu0 %v501
    %v503 = vand.u32 %v60, 4294901760
    %504 = vmatprep.subr.mxu0 %v503
    %v505 = vand.u32 %v59, 4294901760
    %506 = vmatpush1.msra.mxu0 %v505
    %507 = vmatprep.subr.mxu0 0.0
    %508 = vmatpush1.msra.mxu0 0.0
    %509 = vmatprep.subr.mxu0 0.0
    %510 = vmatpush1.msra.mxu0 0.0
    %511 = vmatprep.subr.mxu0 0.0
    %512 = vmatpush1.msra.mxu0 0.0
    %513 = vmatprep.subr.mxu0 0.0
    %514 = vmatpush1.msra.mxu0 0.0
    %515 = vmatprep.subr.mxu0 0.0
    %516 = vmatpush1.msra.mxu0 0.0
    %517 = vmatprep.subr.mxu0 0.0
    %518 = vmatpush1.msra.mxu0 0.0
    %519 = vmatprep.subr.mxu0 0.0
    %520 = vmatpush1.msra.mxu0 0.0
    %521 = vmatprep.subr.mxu0 0.0
    %522 = vmatpush1.msra.mxu0 0.0
    %523 = vmatprep.subr.mxu0 0.0
    %524 = vmatpush1.msra.mxu0 0.0
    %525 = vmatprep.subr.mxu0 0.0
    %526 = vmatpush1.msra.mxu0 0.0
    %527 = vmatprep.subr.mxu0 0.0
    %528 = vmatpush1.msra.mxu0 0.0
    %529 = vmatprep.subr.mxu0 0.0
    %530 = vmatpush1.msra.mxu0 0.0
    %531 = vmatprep.subr.mxu0 0.0
    %532 = vmatpush1.msra.mxu0 0.0
    %533 = vmatprep.subr.mxu0 0.0
    %534 = vmatpush1.msra.mxu0 0.0
    %535 = vmatprep.subr.mxu0 0.0
    %536 = vmatpush1.msra.mxu0 0.0
    %537 = vmatprep.subr.mxu0 0.0
    %538 = vmatpush1.msra.mxu0 0.0
    %539 = vmatprep.subr.mxu0 0.0
    %540 = vmatpush1.msra.mxu0 0.0
    %541 = vmatprep.subr.mxu0 0.0
    %542 = vmatpush1.msra.mxu0 0.0
    %543 = vmatprep.subr.mxu0 0.0
    %544 = vmatpush1.msra.mxu0 0.0
    %545 = vmatprep.subr.mxu0 0.0
    %546 = vmatpush1.msra.mxu0 0.0
    %547 = vmatprep.subr.mxu0 0.0
    %548 = vmatpush1.msra.mxu0 0.0
    %549 = vmatprep.subr.mxu0 0.0
    %550 = vmatpush1.msra.mxu0 0.0
    %551 = vmatprep.subr.mxu0 0.0
    %552 = vmatpush1.msra.mxu0 0.0
    %553 = vmatprep.subr.mxu0 0.0
    %554 = vmatpush1.msra.mxu0 0.0
    %555 = vmatprep.subr.mxu0 0.0
    %556 = vmatpush1.msra.mxu0 0.0
    %557 = vmatprep.subr.mxu0 0.0
    %558 = vmatpush1.msra.mxu0 0.0
    %559 = vmatprep.subr.mxu0 0.0
    %560 = vmatpush1.msra.mxu0 0.0
    %561 = vmatprep.subr.mxu0 0.0
    %562 = vmatpush1.msra.mxu0 0.0
    %563 = vmatprep.subr.mxu0 0.0
    %564 = vmatpush1.msra.mxu0 0.0
    %565 = vmatprep.mubr.f32.mxu0 0.0
    %v566 = vand.u32 %v166, 4294901760
    %v567 = vsub.f32 %v166, %v566
    %v568 = vand.u32 %v567, 4294901760
    %569 = vmatmul.mubr.f32.gmra.mrb[0].mxu0 %v568
    %v570 = vpop.f32.mrb[0].mxu0
    %v571 = vadd.f32 %v475, %v570
    %v572 = vpop.f32.mrb[0].mxu0
    %v573 = vadd.f32 %v477, %v572
    %574 = vmatprep.mubr.f32.mxu0 0.0
    %v575 = vand.u32 %v169, 4294901760
    %v576 = vsub.f32 %v169, %v575
    %v577 = vand.u32 %v576, 4294901760
    %578 = vmatmul.mubr.f32.gmra.mrb[0].mxu0 %v577
    %v579 = vpop.f32.mrb[0].mxu0
    %v580 = vadd.f32 %v483, %v579
    %v581 = vpop.f32.mrb[0].mxu0
    %v582 = vadd.f32 %v485, %v581
    %583 = vmatprep.mubr.f32.mxu0 0.0
    %v584 = vand.u32 %v172, 4294901760
    %v585 = vsub.f32 %v172, %v584
    %v586 = vand.u32 %v585, 4294901760
    %587 = vmatmul.mubr.f32.gmra.mrb[0].mxu0 %v586
    %v588 = vpop.f32.mrb[0].mxu0
    %v589 = vadd.f32 %v491, %v588
    %v590 = vpop.f32.mrb[0].mxu0
    %v591 = vadd.f32 %v493, %v590
    %592 = vdwg.mxu0
    %v593 = vand.u32 %v161, 4294901760
    %v594 = vsub.f32 %v161, %v593
    %v595 = vand.u32 %v594, 4294901760
    %596 = vmatprep.subr.mxu0 %v595
    %v597 = vand.u32 %v160, 4294901760
    %v598 = vsub.f32 %v160, %v597
    %v599 = vand.u32 %v598, 4294901760
    %600 = vmatpush1.msra.mxu0 %v599
    %v601 = vand.u32 %v163, 4294901760
    %v602 = vsub.f32 %v163, %v601
    %v603 = vand.u32 %v602, 4294901760
    %604 = vmatprep.subr.mxu0 %v603
    %v605 = vand.u32 %v162, 4294901760
    %v606 = vsub.f32 %v162, %v605
    %v607 = vand.u32 %v606, 4294901760
    %608 = vmatpush1.msra.mxu0 %v607
    %v609 = vand.u32 %v60, 4294901760
    %v610 = vsub.f32 %v60, %v609
    %v611 = vand.u32 %v610, 4294901760
    %612 = vmatprep.subr.mxu0 %v611
    %v613 = vand.u32 %v59, 4294901760
    %v614 = vsub.f32 %v59, %v613
    %v615 = vand.u32 %v614, 4294901760
    %616 = vmatpush1.msra.mxu0 %v615
    %617 = vmatprep.subr.mxu0 0.0
    %618 = vmatpush1.msra.mxu0 0.0
    %619 = vmatprep.subr.mxu0 0.0
    %620 = vmatpush1.msra.mxu0 0.0
    %621 = vmatprep.subr.mxu0 0.0
    %622 = vmatpush1.msra.mxu0 0.0
    %623 = vmatprep.subr.mxu0 0.0
    %624 = vmatpush1.msra.mxu0 0.0
    %625 = vmatprep.subr.mxu0 0.0
    %626 = vmatpush1.msra.mxu0 0.0
    %627 = vmatprep.subr.mxu0 0.0
    %628 = vmatpush1.msra.mxu0 0.0
    %629 = vmatprep.subr.mxu0 0.0
    %630 = vmatpush1.msra.mxu0 0.0
    %631 = vmatprep.subr.mxu0 0.0
    %632 = vmatpush1.msra.mxu0 0.0
    %633 = vmatprep.subr.mxu0 0.0
    %634 = vmatpush1.msra.mxu0 0.0
    %635 = vmatprep.subr.mxu0 0.0
    %636 = vmatpush1.msra.mxu0 0.0
    %637 = vmatprep.subr.mxu0 0.0
    %638 = vmatpush1.msra.mxu0 0.0
    %639 = vmatprep.subr.mxu0 0.0
    %640 = vmatpush1.msra.mxu0 0.0
    %641 = vmatprep.subr.mxu0 0.0
    %642 = vmatpush1.msra.mxu0 0.0
    %643 = vmatprep.subr.mxu0 0.0
    %644 = vmatpush1.msra.mxu0 0.0
    %645 = vmatprep.subr.mxu0 0.0
    %646 = vmatpush1.msra.mxu0 0.0
    %647 = vmatprep.subr.mxu0 0.0
    %648 = vmatpush1.msra.mxu0 0.0
    %649 = vmatprep.subr.mxu0 0.0
    %650 = vmatpush1.msra.mxu0 0.0
    %651 = vmatprep.subr.mxu0 0.0
    %652 = vmatpush1.msra.mxu0 0.0
    %653 = vmatprep.subr.mxu0 0.0
    %654 = vmatpush1.msra.mxu0 0.0
    %655 = vmatprep.subr.mxu0 0.0
    %656 = vmatpush1.msra.mxu0 0.0
    %657 = vmatprep.subr.mxu0 0.0
    %658 = vmatpush1.msra.mxu0 0.0
    %659 = vmatprep.subr.mxu0 0.0
    %660 = vmatpush1.msra.mxu0 0.0
    %661 = vmatprep.subr.mxu0 0.0
    %662 = vmatpush1.msra.mxu0 0.0
    %663 = vmatprep.subr.mxu0 0.0
    %664 = vmatpush1.msra.mxu0 0.0
    %665 = vmatprep.subr.mxu0 0.0
    %666 = vmatpush1.msra.mxu0 0.0
    %667 = vmatprep.subr.mxu0 0.0
    %668 = vmatpush1.msra.mxu0 0.0
    %669 = vmatprep.subr.mxu0 0.0
    %670 = vmatpush1.msra.mxu0 0.0
    %671 = vmatprep.subr.mxu0 0.0
    %672 = vmatpush1.msra.mxu0 0.0
    %673 = vmatprep.subr.mxu0 0.0
    %674 = vmatpush1.msra.mxu0 0.0
    %675 = vmatprep.mubr.f32.mxu0 0.0
    %v676 = vand.u32 %v166, 4294901760
    %677 = vmatmul.mubr.f32.gmra.mrb[0].mxu0 %v676
    %v678 = vpop.f32.mrb[0].mxu0
    %v679 = vadd.f32 %v571, %v678
    %v680 = vpop.f32.mrb[0].mxu0
    %v681 = vadd.f32 %v573, %v680
    %682 = vmatprep.mubr.f32.mxu0 0.0
    %v683 = vand.u32 %v169, 4294901760
    %684 = vmatmul.mubr.f32.gmra.mrb[0].mxu0 %v683
    %v685 = vpop.f32.mrb[0].mxu0
    %v686 = vadd.f32 %v580, %v685
    %v687 = vpop.f32.mrb[0].mxu0
    %v688 = vadd.f32 %v582, %v687
    %689 = vmatprep.mubr.f32.mxu0 0.0
    %v690 = vand.u32 %v172, 4294901760
    %691 = vmatmul.mubr.f32.gmra.mrb[0].mxu0 %v690
    %v692 = vpop.f32.mrb[0].mxu0
    %v693 = vadd.f32 %v589, %v692
    %v694 = vpop.f32.mrb[0].mxu0
    %v695 = vadd.f32 %v591, %v694
    %696 = vdwg.mxu0
    %v697 = vand.u32 %v161, 4294901760
    %698 = vmatprep.subr.mxu0 %v697
    %v699 = vand.u32 %v160, 4294901760
    %700 = vmatpush1.msra.mxu0 %v699
    %v701 = vand.u32 %v163, 4294901760
    %702 = vmatprep.subr.mxu0 %v701
    %v703 = vand.u32 %v162, 4294901760
    %704 = vmatpush1.msra.mxu0 %v703
    %v705 = vand.u32 %v60, 4294901760
    %706 = vmatprep.subr.mxu0 %v705
    %v707 = vand.u32 %v59, 4294901760
    %708 = vmatpush1.msra.mxu0 %v707
    %709 = vmatprep.subr.mxu0 0.0
    %710 = vmatpush1.msra.mxu0 0.0
    %711 = vmatprep.subr.mxu0 0.0
    %712 = vmatpush1.msra.mxu0 0.0
    %713 = vmatprep.subr.mxu0 0.0
    %714 = vmatpush1.msra.mxu0 0.0
    %715 = vmatprep.subr.mxu0 0.0
    %716 = vmatpush1.msra.mxu0 0.0
    %717 = vmatprep.subr.mxu0 0.0
    %718 = vmatpush1.msra.mxu0 0.0
    %719 = vmatprep.subr.mxu0 0.0
    %720 = vmatpush1.msra.mxu0 0.0
    %721 = vmatprep.subr.mxu0 0.0
    %722 = vmatpush1.msra.mxu0 0.0
    %723 = vmatprep.subr.mxu0 0.0
    %724 = vmatpush1.msra.mxu0 0.0
    %725 = vmatprep.subr.mxu0 0.0
    %726 = vmatpush1.msra.mxu0 0.0
    %727 = vmatprep.subr.mxu0 0.0
    %728 = vmatpush1.msra.mxu0 0.0
    %729 = vmatprep.subr.mxu0 0.0
    %730 = vmatpush1.msra.mxu0 0.0
    %731 = vmatprep.subr.mxu0 0.0
    %732 = vmatpush1.msra.mxu0 0.0
    %733 = vmatprep.subr.mxu0 0.0
    %734 = vmatpush1.msra.mxu0 0.0
    %735 = vmatprep.subr.mxu0 0.0
    %736 = vmatpush1.msra.mxu0 0.0
    %737 = vmatprep.subr.mxu0 0.0
    %738 = vmatpush1.msra.mxu0 0.0
    %739 = vmatprep.subr.mxu0 0.0
    %740 = vmatpush1.msra.mxu0 0.0
    %741 = vmatprep.subr.mxu0 0.0
    %742 = vmatpush1.msra.mxu0 0.0
    %743 = vmatprep.subr.mxu0 0.0
    %744 = vmatpush1.msra.mxu0 0.0
    %745 = vmatprep.subr.mxu0 0.0
    %746 = vmatpush1.msra.mxu0 0.0
    %747 = vmatprep.subr.mxu0 0.0
    %748 = vmatpush1.msra.mxu0 0.0
    %749 = vmatprep.subr.mxu0 0.0
    %750 = vmatpush1.msra.mxu0 0.0
    %751 = vmatprep.subr.mxu0 0.0
    %752 = vmatpush1.msra.mxu0 0.0
    %753 = vmatprep.subr.mxu0 0.0
    %754 = vmatpush1.msra.mxu0 0.0
    %755 = vmatprep.subr.mxu0 0.0
    %756 = vmatpush1.msra.mxu0 0.0
    %757 = vmatprep.subr.mxu0 0.0
    %758 = vmatpush1.msra.mxu0 0.0
    %759 = vmatprep.subr.mxu0 0.0
    %760 = vmatpush1.msra.mxu0 0.0
    %761 = vmatprep.subr.mxu0 0.0
    %762 = vmatpush1.msra.mxu0 0.0
    %763 = vmatprep.subr.mxu0 0.0
    %764 = vmatpush1.msra.mxu0 0.0
    %765 = vmatprep.subr.mxu0 0.0
    %766 = vmatpush1.msra.mxu0 0.0
    %767 = vmatprep.mubr.f32.mxu0 0.0
    %v768 = vand.u32 %v166, 4294901760
    %769 = vmatmul.mubr.f32.gmra.mrb[0].mxu0 %v768
    %v770 = vpop.f32.mrb[0].mxu0
    %v771 = vadd.f32 %v679, %v770
    %v772 = vpop.f32.mrb[0].mxu0
    %v773 = vadd.f32 %v681, %v772
    %774 = vmatprep.mubr.f32.mxu0 0.0
    %v775 = vand.u32 %v169, 4294901760
    %776 = vmatmul.mubr.f32.gmra.mrb[0].mxu0 %v775
    %v777 = vpop.f32.mrb[0].mxu0
    %v778 = vadd.f32 %v686, %v777
    %v779 = vpop.f32.mrb[0].mxu0
    %v780 = vadd.f32 %v688, %v779
    %781 = vmatprep.mubr.f32.mxu0 0.0
    %v782 = vand.u32 %v172, 4294901760
    %783 = vmatmul.mubr.f32.gmra.mrb[0].mxu0 %v782
    %v784 = vpop.f32.mrb[0].mxu0
    %v785 = vadd.f32 %v693, %v784
    %v786 = vpop.f32.mrb[0].mxu0
    %v787 = vadd.f32 %v695, %v786
    %788 = vdwg.mxu0
    %v789 = vadd.f32 %v771, 1e-10
    %v790 = vadd.f32 %v773, 1e-10
    %v791 = vrcp.pop %v789
    %v792 = vrcp.pop %v790
    %v793 = vlaneseq
    %v794 = vshrl.u32 %v793, 7
    %v795 = vsub.s32 3, %v794
    %v796 = vrot.slane %v791, %v795
    %v797 = vlaneseq
    %v798 = vshrl.u32 %v797, 7
    %v799 = vsub.s32 3, %v798
    %v800 = vrot.slane %v792, %v799
    %v801 = vmul.f32 %v771, %v796
    %v802 = vmul.f32 %v773, %v800
    %v803 = vsel %vm154, %v801, %v771
    %v804 = vsel %vm154, %v802, %v773
    %805 = vst [vmem:[#allocation8] sm:$0xff] %v803
    %806 = vst [vmem:[#allocation8 + $0x8] sm:$0xff] %v804
    %807 = vst [vmem:[#allocation8 + $0x10] sm:$0xff] %v778
    %808 = vst [vmem:[#allocation8 + $0x18] sm:$0xff] %v780
    %809 = vst [vmem:[#allocation8 + $0x20] sm:$0xff] %v785
    %810 = vst [vmem:[#allocation8 + $0x28] sm:$0xff] %v787
    %s811 = scalar_lea.vmem [#allocation5], 48
    %v812 = vld [vmem:[%s811] sm:$0xff]
    %v813 = vld [vmem:[%s811 + $0x8] sm:$0xff]
    %v814 = vld [vmem:[%s811 + $0x10] sm:$0xff]
    %v815 = vld [vmem:[%s811 + $0x18] sm:$0xff]
    %v816 = vld [vmem:[%s811 + $0x20] sm:$0xff]
    %v817 = vld [vmem:[%s811 + $0x28] sm:$0xff]
    %s818 = scalar_lea.vmem [#allocation2], 24
    %v819 = vld [vmem:[%s818] sm:$0xff]
    %v820 = vld [vmem:[%s818 + $0x8] sm:$0xff]
    %v821 = vld [vmem:[%s818 + $0x10] sm:$0xff]
    %v822 = vsub.f32 0.0, %v812
    %v823 = vsub.f32 0.0, %v813
    %v826 = vrot.slane %v822, 3
    %v827 = vrot.slane %v823, 3
    %v832 = vrot.slane %v812, 3
    %v833 = vrot.slane %v813, 3
    %v836 = vsel %vm78, %v822, %v826
    %v837 = vsel %vm78, %v823, %v827
    %v838 = vsel %vm81, %v836, %v832
    %v839 = vsel %vm81, %v837, %v833
    %v840 = vmul.f32 %v838, 1.442695
    %v841 = vpow.pop %v840
    %v842 = vmul.f32 %v839, 1.442695
    %v843 = vpow.pop %v842
    %v844 = vadd.f32 %v841, 1.0
    %v845 = vadd.f32 %v843, 1.0
    %v846 = vrcp.pop %v844
    %v847 = vmul.f32 1.0, %v846
    %v848 = vrcp.pop %v845
    %v849 = vmul.f32 1.0, %v848
    %v850 = vmul.f32 %v847, 2.4
    %v851 = vmul.f32 %v849, 2.4
    %v852 = vadd.f32 %v850, 0.8
    %v853 = vadd.f32 %v851, 0.8
    %v854 = vlaneseq
    %v855 = vshrl.u32 %v854, 7
    %v856 = vsub.s32 0, %v855
    %v857 = vrot.slane %v852, %v856
    %v858 = vlaneseq
    %v859 = vshrl.u32 %v858, 7
    %v860 = vsub.s32 0, %v859
    %v861 = vrot.slane %v853, %v860
    %v864 = vcombine.low %v857, %v861
    %v866 = vmul.f32 %v54, %v864
    %v867 = vcombine.low %v812, %v813
    %v868 = vrot.slane %v867, 5
    %v869 = vrot.slane %v868, 4
    %v871 = vadd.f32 %v866, %v869
    %v872 = vmul.f32 %v814, %v814
    %v873 = vmul.f32 %v815, %v815
    %v874 = vsel %vm118, %v872, 0.0
    %v875 = vrot.slane %v874, 4
    %v876 = vadd.f32 %v874, %v875
    %v877 = vrot.slane %v876, 2
    %v878 = vadd.f32 %v876, %v877
    %v879 = vrot.slane %v878, 1
    %v880 = vadd.f32 %v878, %v879
    %v881 = vsel %vm118, %v873, 0.0
    %v882 = vrot.slane %v881, 4
    %v883 = vadd.f32 %v881, %v882
    %v884 = vrot.slane %v883, 2
    %v885 = vadd.f32 %v883, %v884
    %v886 = vrot.slane %v885, 1
    %v887 = vadd.f32 %v885, %v886
    %v888 = vmax.f32 %v880, 1e-24
    %v889 = vmax.f32 %v887, 1e-24
    %v890 = vrsqrt.pop %v888
    %v891 = vrsqrt.pop %v889
    %v892 = vmul.f32 %v814, %v890
    %v893 = vmul.f32 %v815, %v891
    %v895 = vcombine.high %v871, %v871
    %v899 = vrot.slane %v847, 5
    %v900 = vrot.slane %v849, 5
    %v905 = vrot.slane %v841, 5
    %v906 = vrot.slane %v843, 5
    %v909 = vsel %vm154, %v871, 1.0
    %v910 = vsel %vm154, %v895, 1.0
    %v911 = vsel %vm118, %v909, %v899
    %v912 = vsel %vm118, %v910, %v900
    %v913 = vsel %vm159, %v911, %v905
    %v914 = vsel %vm159, %v912, %v906
    %v915 = vsel %vm118, %v892, %v814
    %v916 = vsel %vm118, %v893, %v815
    %v918 = vsel %vm164, %v819, 0
    %v921 = vsel %vm164, %v820, 0
    %v924 = vsel %vm164, %v821, 0
    %v926 = vand.u32 %v914, 4294901760
    %927 = vmatprep.subr.mxu0 %v926
    %v928 = vand.u32 %v913, 4294901760
    %929 = vmatpush1.msra.mxu0 %v928
    %v930 = vand.u32 %v916, 4294901760
    %931 = vmatprep.subr.mxu0 %v930
    %v932 = vand.u32 %v915, 4294901760
    %933 = vmatpush1.msra.mxu0 %v932
    %v934 = vand.u32 %v817, 4294901760
    %935 = vmatprep.subr.mxu0 %v934
    %v936 = vand.u32 %v816, 4294901760
    %937 = vmatpush1.msra.mxu0 %v936
    %938 = vmatprep.subr.mxu0 0.0
    %939 = vmatpush1.msra.mxu0 0.0
    %940 = vmatprep.subr.mxu0 0.0
    %941 = vmatpush1.msra.mxu0 0.0
    %942 = vmatprep.subr.mxu0 0.0
    %943 = vmatpush1.msra.mxu0 0.0
    %944 = vmatprep.subr.mxu0 0.0
    %945 = vmatpush1.msra.mxu0 0.0
    %946 = vmatprep.subr.mxu0 0.0
    %947 = vmatpush1.msra.mxu0 0.0
    %948 = vmatprep.subr.mxu0 0.0
    %949 = vmatpush1.msra.mxu0 0.0
    %950 = vmatprep.subr.mxu0 0.0
    %951 = vmatpush1.msra.mxu0 0.0
    %952 = vmatprep.subr.mxu0 0.0
    %953 = vmatpush1.msra.mxu0 0.0
    %954 = vmatprep.subr.mxu0 0.0
    %955 = vmatpush1.msra.mxu0 0.0
    %956 = vmatprep.subr.mxu0 0.0
    %957 = vmatpush1.msra.mxu0 0.0
    %958 = vmatprep.subr.mxu0 0.0
    %959 = vmatpush1.msra.mxu0 0.0
    %960 = vmatprep.subr.mxu0 0.0
    %961 = vmatpush1.msra.mxu0 0.0
    %962 = vmatprep.subr.mxu0 0.0
    %963 = vmatpush1.msra.mxu0 0.0
    %964 = vmatprep.subr.mxu0 0.0
    %965 = vmatpush1.msra.mxu0 0.0
    %966 = vmatprep.subr.mxu0 0.0
    %967 = vmatpush1.msra.mxu0 0.0
    %968 = vmatprep.subr.mxu0 0.0
    %969 = vmatpush1.msra.mxu0 0.0
    %970 = vmatprep.subr.mxu0 0.0
    %971 = vmatpush1.msra.mxu0 0.0
    %972 = vmatprep.subr.mxu0 0.0
    %973 = vmatpush1.msra.mxu0 0.0
    %974 = vmatprep.subr.mxu0 0.0
    %975 = vmatpush1.msra.mxu0 0.0
    %976 = vmatprep.subr.mxu0 0.0
    %977 = vmatpush1.msra.mxu0 0.0
    %978 = vmatprep.subr.mxu0 0.0
    %979 = vmatpush1.msra.mxu0 0.0
    %980 = vmatprep.subr.mxu0 0.0
    %981 = vmatpush1.msra.mxu0 0.0
    %982 = vmatprep.subr.mxu0 0.0
    %983 = vmatpush1.msra.mxu0 0.0
    %984 = vmatprep.subr.mxu0 0.0
    %985 = vmatpush1.msra.mxu0 0.0
    %986 = vmatprep.subr.mxu0 0.0
    %987 = vmatpush1.msra.mxu0 0.0
    %988 = vmatprep.subr.mxu0 0.0
    %989 = vmatpush1.msra.mxu0 0.0
    %990 = vmatprep.subr.mxu0 0.0
    %991 = vmatpush1.msra.mxu0 0.0
    %992 = vmatprep.subr.mxu0 0.0
    %993 = vmatpush1.msra.mxu0 0.0
    %994 = vmatprep.subr.mxu0 0.0
    %995 = vmatpush1.msra.mxu0 0.0
    %996 = vmatprep.mubr.f32.mxu0 0.0
    %v997 = vand.u32 %v918, 4294901760
    %v998 = vsub.f32 %v918, %v997
    %v999 = vand.u32 %v998, 4294901760
    %v1000 = vsub.f32 %v998, %v999
    %v1001 = vand.u32 %v1000, 4294901760
    %1002 = vmatmul.mubr.f32.gmra.mrb[0].mxu0 %v1001
    %v1003 = vpop.f32.mrb[0].mxu0
    %v1004 = vadd.f32 0.0, %v1003
    %v1005 = vpop.f32.mrb[0].mxu0
    %v1006 = vadd.f32 0.0, %v1005
    %1007 = vmatprep.mubr.f32.mxu0 0.0
    %v1008 = vand.u32 %v921, 4294901760
    %v1009 = vsub.f32 %v921, %v1008
    %v1010 = vand.u32 %v1009, 4294901760
    %v1011 = vsub.f32 %v1009, %v1010
    %v1012 = vand.u32 %v1011, 4294901760
    %1013 = vmatmul.mubr.f32.gmra.mrb[0].mxu0 %v1012
    %v1014 = vpop.f32.mrb[0].mxu0
    %v1015 = vadd.f32 0.0, %v1014
    %v1016 = vpop.f32.mrb[0].mxu0
    %v1017 = vadd.f32 0.0, %v1016
    %1018 = vmatprep.mubr.f32.mxu0 0.0
    %v1019 = vand.u32 %v924, 4294901760
    %v1020 = vsub.f32 %v924, %v1019
    %v1021 = vand.u32 %v1020, 4294901760
    %v1022 = vsub.f32 %v1020, %v1021
    %v1023 = vand.u32 %v1022, 4294901760
    %1024 = vmatmul.mubr.f32.gmra.mrb[0].mxu0 %v1023
    %v1025 = vpop.f32.mrb[0].mxu0
    %v1026 = vadd.f32 0.0, %v1025
    %v1027 = vpop.f32.mrb[0].mxu0
    %v1028 = vadd.f32 0.0, %v1027
    %1029 = vdwg.mxu0
    %v1030 = vand.u32 %v914, 4294901760
    %v1031 = vsub.f32 %v914, %v1030
    %v1032 = vand.u32 %v1031, 4294901760
    %v1033 = vsub.f32 %v1031, %v1032
    %v1034 = vand.u32 %v1033, 4294901760
    %1035 = vmatprep.subr.mxu0 %v1034
    %v1036 = vand.u32 %v913, 4294901760
    %v1037 = vsub.f32 %v913, %v1036
    %v1038 = vand.u32 %v1037, 4294901760
    %v1039 = vsub.f32 %v1037, %v1038
    %v1040 = vand.u32 %v1039, 4294901760
    %1041 = vmatpush1.msra.mxu0 %v1040
    %v1042 = vand.u32 %v916, 4294901760
    %v1043 = vsub.f32 %v916, %v1042
    %v1044 = vand.u32 %v1043, 4294901760
    %v1045 = vsub.f32 %v1043, %v1044
    %v1046 = vand.u32 %v1045, 4294901760
    %1047 = vmatprep.subr.mxu0 %v1046
    %v1048 = vand.u32 %v915, 4294901760
    %v1049 = vsub.f32 %v915, %v1048
    %v1050 = vand.u32 %v1049, 4294901760
    %v1051 = vsub.f32 %v1049, %v1050
    %v1052 = vand.u32 %v1051, 4294901760
    %1053 = vmatpush1.msra.mxu0 %v1052
    %v1054 = vand.u32 %v817, 4294901760
    %v1055 = vsub.f32 %v817, %v1054
    %v1056 = vand.u32 %v1055, 4294901760
    %v1057 = vsub.f32 %v1055, %v1056
    %v1058 = vand.u32 %v1057, 4294901760
    %1059 = vmatprep.subr.mxu0 %v1058
    %v1060 = vand.u32 %v816, 4294901760
    %v1061 = vsub.f32 %v816, %v1060
    %v1062 = vand.u32 %v1061, 4294901760
    %v1063 = vsub.f32 %v1061, %v1062
    %v1064 = vand.u32 %v1063, 4294901760
    %1065 = vmatpush1.msra.mxu0 %v1064
    %1066 = vmatprep.subr.mxu0 0.0
    %1067 = vmatpush1.msra.mxu0 0.0
    %1068 = vmatprep.subr.mxu0 0.0
    %1069 = vmatpush1.msra.mxu0 0.0
    %1070 = vmatprep.subr.mxu0 0.0
    %1071 = vmatpush1.msra.mxu0 0.0
    %1072 = vmatprep.subr.mxu0 0.0
    %1073 = vmatpush1.msra.mxu0 0.0
    %1074 = vmatprep.subr.mxu0 0.0
    %1075 = vmatpush1.msra.mxu0 0.0
    %1076 = vmatprep.subr.mxu0 0.0
    %1077 = vmatpush1.msra.mxu0 0.0
    %1078 = vmatprep.subr.mxu0 0.0
    %1079 = vmatpush1.msra.mxu0 0.0
    %1080 = vmatprep.subr.mxu0 0.0
    %1081 = vmatpush1.msra.mxu0 0.0
    %1082 = vmatprep.subr.mxu0 0.0
    %1083 = vmatpush1.msra.mxu0 0.0
    %1084 = vmatprep.subr.mxu0 0.0
    %1085 = vmatpush1.msra.mxu0 0.0
    %1086 = vmatprep.subr.mxu0 0.0
    %1087 = vmatpush1.msra.mxu0 0.0
    %1088 = vmatprep.subr.mxu0 0.0
    %1089 = vmatpush1.msra.mxu0 0.0
    %1090 = vmatprep.subr.mxu0 0.0
    %1091 = vmatpush1.msra.mxu0 0.0
    %1092 = vmatprep.subr.mxu0 0.0
    %1093 = vmatpush1.msra.mxu0 0.0
    %1094 = vmatprep.subr.mxu0 0.0
    %1095 = vmatpush1.msra.mxu0 0.0
    %1096 = vmatprep.subr.mxu0 0.0
    %1097 = vmatpush1.msra.mxu0 0.0
    %1098 = vmatprep.subr.mxu0 0.0
    %1099 = vmatpush1.msra.mxu0 0.0
    %1100 = vmatprep.subr.mxu0 0.0
    %1101 = vmatpush1.msra.mxu0 0.0
    %1102 = vmatprep.subr.mxu0 0.0
    %1103 = vmatpush1.msra.mxu0 0.0
    %1104 = vmatprep.subr.mxu0 0.0
    %1105 = vmatpush1.msra.mxu0 0.0
    %1106 = vmatprep.subr.mxu0 0.0
    %1107 = vmatpush1.msra.mxu0 0.0
    %1108 = vmatprep.subr.mxu0 0.0
    %1109 = vmatpush1.msra.mxu0 0.0
    %1110 = vmatprep.subr.mxu0 0.0
    %1111 = vmatpush1.msra.mxu0 0.0
    %1112 = vmatprep.subr.mxu0 0.0
    %1113 = vmatpush1.msra.mxu0 0.0
    %1114 = vmatprep.subr.mxu0 0.0
    %1115 = vmatpush1.msra.mxu0 0.0
    %1116 = vmatprep.subr.mxu0 0.0
    %1117 = vmatpush1.msra.mxu0 0.0
    %1118 = vmatprep.subr.mxu0 0.0
    %1119 = vmatpush1.msra.mxu0 0.0
    %1120 = vmatprep.subr.mxu0 0.0
    %1121 = vmatpush1.msra.mxu0 0.0
    %1122 = vmatprep.subr.mxu0 0.0
    %1123 = vmatpush1.msra.mxu0 0.0
    %1124 = vmatprep.mubr.f32.mxu0 0.0
    %v1125 = vand.u32 %v918, 4294901760
    %1126 = vmatmul.mubr.f32.gmra.mrb[0].mxu0 %v1125
    %v1127 = vpop.f32.mrb[0].mxu0
    %v1128 = vadd.f32 %v1004, %v1127
    %v1129 = vpop.f32.mrb[0].mxu0
    %v1130 = vadd.f32 %v1006, %v1129
    %1131 = vmatprep.mubr.f32.mxu0 0.0
    %v1132 = vand.u32 %v921, 4294901760
    %1133 = vmatmul.mubr.f32.gmra.mrb[0].mxu0 %v1132
    %v1134 = vpop.f32.mrb[0].mxu0
    %v1135 = vadd.f32 %v1015, %v1134
    %v1136 = vpop.f32.mrb[0].mxu0
    %v1137 = vadd.f32 %v1017, %v1136
    %1138 = vmatprep.mubr.f32.mxu0 0.0
    %v1139 = vand.u32 %v924, 4294901760
    %1140 = vmatmul.mubr.f32.gmra.mrb[0].mxu0 %v1139
    %v1141 = vpop.f32.mrb[0].mxu0
    %v1142 = vadd.f32 %v1026, %v1141
    %v1143 = vpop.f32.mrb[0].mxu0
    %v1144 = vadd.f32 %v1028, %v1143
    %1145 = vdwg.mxu0
    %v1146 = vand.u32 %v914, 4294901760
    %v1147 = vsub.f32 %v914, %v1146
    %1148 = vmatprep.subr.mxu0 %v1147
    %v1149 = vand.u32 %v913, 4294901760
    %v1150 = vsub.f32 %v913, %v1149
    %1151 = vmatpush1.msra.mxu0 %v1150
    %v1152 = vand.u32 %v916, 4294901760
    %v1153 = vsub.f32 %v916, %v1152
    %1154 = vmatprep.subr.mxu0 %v1153
    %v1155 = vand.u32 %v915, 4294901760
    %v1156 = vsub.f32 %v915, %v1155
    %1157 = vmatpush1.msra.mxu0 %v1156
    %v1158 = vand.u32 %v817, 4294901760
    %v1159 = vsub.f32 %v817, %v1158
    %1160 = vmatprep.subr.mxu0 %v1159
    %v1161 = vand.u32 %v816, 4294901760
    %v1162 = vsub.f32 %v816, %v1161
    %1163 = vmatpush1.msra.mxu0 %v1162
    %1164 = vmatprep.subr.mxu0 0.0
    %1165 = vmatpush1.msra.mxu0 0.0
    %1166 = vmatprep.subr.mxu0 0.0
    %1167 = vmatpush1.msra.mxu0 0.0
    %1168 = vmatprep.subr.mxu0 0.0
    %1169 = vmatpush1.msra.mxu0 0.0
    %1170 = vmatprep.subr.mxu0 0.0
    %1171 = vmatpush1.msra.mxu0 0.0
    %1172 = vmatprep.subr.mxu0 0.0
    %1173 = vmatpush1.msra.mxu0 0.0
    %1174 = vmatprep.subr.mxu0 0.0
    %1175 = vmatpush1.msra.mxu0 0.0
    %1176 = vmatprep.subr.mxu0 0.0
    %1177 = vmatpush1.msra.mxu0 0.0
    %1178 = vmatprep.subr.mxu0 0.0
    %1179 = vmatpush1.msra.mxu0 0.0
    %1180 = vmatprep.subr.mxu0 0.0
    %1181 = vmatpush1.msra.mxu0 0.0
    %1182 = vmatprep.subr.mxu0 0.0
    %1183 = vmatpush1.msra.mxu0 0.0
    %1184 = vmatprep.subr.mxu0 0.0
    %1185 = vmatpush1.msra.mxu0 0.0
    %1186 = vmatprep.subr.mxu0 0.0
    %1187 = vmatpush1.msra.mxu0 0.0
    %1188 = vmatprep.subr.mxu0 0.0
    %1189 = vmatpush1.msra.mxu0 0.0
    %1190 = vmatprep.subr.mxu0 0.0
    %1191 = vmatpush1.msra.mxu0 0.0
    %1192 = vmatprep.subr.mxu0 0.0
    %1193 = vmatpush1.msra.mxu0 0.0
    %1194 = vmatprep.subr.mxu0 0.0
    %1195 = vmatpush1.msra.mxu0 0.0
    %1196 = vmatprep.subr.mxu0 0.0
    %1197 = vmatpush1.msra.mxu0 0.0
    %1198 = vmatprep.subr.mxu0 0.0
    %1199 = vmatpush1.msra.mxu0 0.0
    %1200 = vmatprep.subr.mxu0 0.0
    %1201 = vmatpush1.msra.mxu0 0.0
    %1202 = vmatprep.subr.mxu0 0.0
    %1203 = vmatpush1.msra.mxu0 0.0
    %1204 = vmatprep.subr.mxu0 0.0
    %1205 = vmatpush1.msra.mxu0 0.0
    %1206 = vmatprep.subr.mxu0 0.0
    %1207 = vmatpush1.msra.mxu0 0.0
    %1208 = vmatprep.subr.mxu0 0.0
    %1209 = vmatpush1.msra.mxu0 0.0
    %1210 = vmatprep.subr.mxu0 0.0
    %1211 = vmatpush1.msra.mxu0 0.0
    %1212 = vmatprep.subr.mxu0 0.0
    %1213 = vmatpush1.msra.mxu0 0.0
    %1214 = vmatprep.subr.mxu0 0.0
    %1215 = vmatpush1.msra.mxu0 0.0
    %1216 = vmatprep.subr.mxu0 0.0
    %1217 = vmatpush1.msra.mxu0 0.0
    %1218 = vmatprep.subr.mxu0 0.0
    %1219 = vmatpush1.msra.mxu0 0.0
    %1220 = vmatprep.subr.mxu0 0.0
    %1221 = vmatpush1.msra.mxu0 0.0
    %1222 = vmatprep.mubr.f32.mxu0 0.0
    %v1223 = vand.u32 %v918, 4294901760
    %v1224 = vsub.f32 %v918, %v1223
    %1225 = vmatmul.mubr.f32.gmra.mrb[0].mxu0 %v1224
    %v1226 = vpop.f32.mrb[0].mxu0
    %v1227 = vadd.f32 %v1128, %v1226
    %v1228 = vpop.f32.mrb[0].mxu0
    %v1229 = vadd.f32 %v1130, %v1228
    %1230 = vmatprep.mubr.f32.mxu0 0.0
    %v1231 = vand.u32 %v921, 4294901760
    %v1232 = vsub.f32 %v921, %v1231
    %1233 = vmatmul.mubr.f32.gmra.mrb[0].mxu0 %v1232
    %v1234 = vpop.f32.mrb[0].mxu0
    %v1235 = vadd.f32 %v1135, %v1234
    %v1236 = vpop.f32.mrb[0].mxu0
    %v1237 = vadd.f32 %v1137, %v1236
    %1238 = vmatprep.mubr.f32.mxu0 0.0
    %v1239 = vand.u32 %v924, 4294901760
    %v1240 = vsub.f32 %v924, %v1239
    %1241 = vmatmul.mubr.f32.gmra.mrb[0].mxu0 %v1240
    %v1242 = vpop.f32.mrb[0].mxu0
    %v1243 = vadd.f32 %v1142, %v1242
    %v1244 = vpop.f32.mrb[0].mxu0
    %v1245 = vadd.f32 %v1144, %v1244
    %1246 = vdwg.mxu0
    %v1247 = vand.u32 %v914, 4294901760
    %1248 = vmatprep.subr.mxu0 %v1247
    %v1249 = vand.u32 %v913, 4294901760
    %1250 = vmatpush1.msra.mxu0 %v1249
    %v1251 = vand.u32 %v916, 4294901760
    %1252 = vmatprep.subr.mxu0 %v1251
    %v1253 = vand.u32 %v915, 4294901760
    %1254 = vmatpush1.msra.mxu0 %v1253
    %v1255 = vand.u32 %v817, 4294901760
    %1256 = vmatprep.subr.mxu0 %v1255
    %v1257 = vand.u32 %v816, 4294901760
    %1258 = vmatpush1.msra.mxu0 %v1257
    %1259 = vmatprep.subr.mxu0 0.0
    %1260 = vmatpush1.msra.mxu0 0.0
    %1261 = vmatprep.subr.mxu0 0.0
    %1262 = vmatpush1.msra.mxu0 0.0
    %1263 = vmatprep.subr.mxu0 0.0
    %1264 = vmatpush1.msra.mxu0 0.0
    %1265 = vmatprep.subr.mxu0 0.0
    %1266 = vmatpush1.msra.mxu0 0.0
    %1267 = vmatprep.subr.mxu0 0.0
    %1268 = vmatpush1.msra.mxu0 0.0
    %1269 = vmatprep.subr.mxu0 0.0
    %1270 = vmatpush1.msra.mxu0 0.0
    %1271 = vmatprep.subr.mxu0 0.0
    %1272 = vmatpush1.msra.mxu0 0.0
    %1273 = vmatprep.subr.mxu0 0.0
    %1274 = vmatpush1.msra.mxu0 0.0
    %1275 = vmatprep.subr.mxu0 0.0
    %1276 = vmatpush1.msra.mxu0 0.0
    %1277 = vmatprep.subr.mxu0 0.0
    %1278 = vmatpush1.msra.mxu0 0.0
    %1279 = vmatprep.subr.mxu0 0.0
    %1280 = vmatpush1.msra.mxu0 0.0
    %1281 = vmatprep.subr.mxu0 0.0
    %1282 = vmatpush1.msra.mxu0 0.0
    %1283 = vmatprep.subr.mxu0 0.0
    %1284 = vmatpush1.msra.mxu0 0.0
    %1285 = vmatprep.subr.mxu0 0.0
    %1286 = vmatpush1.msra.mxu0 0.0
    %1287 = vmatprep.subr.mxu0 0.0
    %1288 = vmatpush1.msra.mxu0 0.0
    %1289 = vmatprep.subr.mxu0 0.0
    %1290 = vmatpush1.msra.mxu0 0.0
    %1291 = vmatprep.subr.mxu0 0.0
    %1292 = vmatpush1.msra.mxu0 0.0
    %1293 = vmatprep.subr.mxu0 0.0
    %1294 = vmatpush1.msra.mxu0 0.0
    %1295 = vmatprep.subr.mxu0 0.0
    %1296 = vmatpush1.msra.mxu0 0.0
    %1297 = vmatprep.subr.mxu0 0.0
    %1298 = vmatpush1.msra.mxu0 0.0
    %1299 = vmatprep.subr.mxu0 0.0
    %1300 = vmatpush1.msra.mxu0 0.0
    %1301 = vmatprep.subr.mxu0 0.0
    %1302 = vmatpush1.msra.mxu0 0.0
    %1303 = vmatprep.subr.mxu0 0.0
    %1304 = vmatpush1.msra.mxu0 0.0
    %1305 = vmatprep.subr.mxu0 0.0
    %1306 = vmatpush1.msra.mxu0 0.0
    %1307 = vmatprep.subr.mxu0 0.0
    %1308 = vmatpush1.msra.mxu0 0.0
    %1309 = vmatprep.subr.mxu0 0.0
    %1310 = vmatpush1.msra.mxu0 0.0
    %1311 = vmatprep.subr.mxu0 0.0
    %1312 = vmatpush1.msra.mxu0 0.0
    %1313 = vmatprep.subr.mxu0 0.0
    %1314 = vmatpush1.msra.mxu0 0.0
    %1315 = vmatprep.subr.mxu0 0.0
    %1316 = vmatpush1.msra.mxu0 0.0
    %1317 = vmatprep.mubr.f32.mxu0 0.0
    %v1318 = vand.u32 %v918, 4294901760
    %v1319 = vsub.f32 %v918, %v1318
    %v1320 = vand.u32 %v1319, 4294901760
    %1321 = vmatmul.mubr.f32.gmra.mrb[0].mxu0 %v1320
    %v1322 = vpop.f32.mrb[0].mxu0
    %v1323 = vadd.f32 %v1227, %v1322
    %v1324 = vpop.f32.mrb[0].mxu0
    %v1325 = vadd.f32 %v1229, %v1324
    %1326 = vmatprep.mubr.f32.mxu0 0.0
    %v1327 = vand.u32 %v921, 4294901760
    %v1328 = vsub.f32 %v921, %v1327
    %v1329 = vand.u32 %v1328, 4294901760
    %1330 = vmatmul.mubr.f32.gmra.mrb[0].mxu0 %v1329
    %v1331 = vpop.f32.mrb[0].mxu0
    %v1332 = vadd.f32 %v1235, %v1331
    %v1333 = vpop.f32.mrb[0].mxu0
    %v1334 = vadd.f32 %v1237, %v1333
    %1335 = vmatprep.mubr.f32.mxu0 0.0
    %v1336 = vand.u32 %v924, 4294901760
    %v1337 = vsub.f32 %v924, %v1336
    %v1338 = vand.u32 %v1337, 4294901760
    %1339 = vmatmul.mubr.f32.gmra.mrb[0].mxu0 %v1338
    %v1340 = vpop.f32.mrb[0].mxu0
    %v1341 = vadd.f32 %v1243, %v1340
    %v1342 = vpop.f32.mrb[0].mxu0
    %v1343 = vadd.f32 %v1245, %v1342
    %1344 = vdwg.mxu0
    %v1345 = vand.u32 %v914, 4294901760
    %v1346 = vsub.f32 %v914, %v1345
    %v1347 = vand.u32 %v1346, 4294901760
    %1348 = vmatprep.subr.mxu0 %v1347
    %v1349 = vand.u32 %v913, 4294901760
    %v1350 = vsub.f32 %v913, %v1349
    %v1351 = vand.u32 %v1350, 4294901760
    %1352 = vmatpush1.msra.mxu0 %v1351
    %v1353 = vand.u32 %v916, 4294901760
    %v1354 = vsub.f32 %v916, %v1353
    %v1355 = vand.u32 %v1354, 4294901760
    %1356 = vmatprep.subr.mxu0 %v1355
    %v1357 = vand.u32 %v915, 4294901760
    %v1358 = vsub.f32 %v915, %v1357
    %v1359 = vand.u32 %v1358, 4294901760
    %1360 = vmatpush1.msra.mxu0 %v1359
    %v1361 = vand.u32 %v817, 4294901760
    %v1362 = vsub.f32 %v817, %v1361
    %v1363 = vand.u32 %v1362, 4294901760
    %1364 = vmatprep.subr.mxu0 %v1363
    %v1365 = vand.u32 %v816, 4294901760
    %v1366 = vsub.f32 %v816, %v1365
    %v1367 = vand.u32 %v1366, 4294901760
    %1368 = vmatpush1.msra.mxu0 %v1367
    %1369 = vmatprep.subr.mxu0 0.0
    %1370 = vmatpush1.msra.mxu0 0.0
    %1371 = vmatprep.subr.mxu0 0.0
    %1372 = vmatpush1.msra.mxu0 0.0
    %1373 = vmatprep.subr.mxu0 0.0
    %1374 = vmatpush1.msra.mxu0 0.0
    %1375 = vmatprep.subr.mxu0 0.0
    %1376 = vmatpush1.msra.mxu0 0.0
    %1377 = vmatprep.subr.mxu0 0.0
    %1378 = vmatpush1.msra.mxu0 0.0
    %1379 = vmatprep.subr.mxu0 0.0
    %1380 = vmatpush1.msra.mxu0 0.0
    %1381 = vmatprep.subr.mxu0 0.0
    %1382 = vmatpush1.msra.mxu0 0.0
    %1383 = vmatprep.subr.mxu0 0.0
    %1384 = vmatpush1.msra.mxu0 0.0
    %1385 = vmatprep.subr.mxu0 0.0
    %1386 = vmatpush1.msra.mxu0 0.0
    %1387 = vmatprep.subr.mxu0 0.0
    %1388 = vmatpush1.msra.mxu0 0.0
    %1389 = vmatprep.subr.mxu0 0.0
    %1390 = vmatpush1.msra.mxu0 0.0
    %1391 = vmatprep.subr.mxu0 0.0
    %1392 = vmatpush1.msra.mxu0 0.0
    %1393 = vmatprep.subr.mxu0 0.0
    %1394 = vmatpush1.msra.mxu0 0.0
    %1395 = vmatprep.subr.mxu0 0.0
    %1396 = vmatpush1.msra.mxu0 0.0
    %1397 = vmatprep.subr.mxu0 0.0
    %1398 = vmatpush1.msra.mxu0 0.0
    %1399 = vmatprep.subr.mxu0 0.0
    %1400 = vmatpush1.msra.mxu0 0.0
    %1401 = vmatprep.subr.mxu0 0.0
    %1402 = vmatpush1.msra.mxu0 0.0
    %1403 = vmatprep.subr.mxu0 0.0
    %1404 = vmatpush1.msra.mxu0 0.0
    %1405 = vmatprep.subr.mxu0 0.0
    %1406 = vmatpush1.msra.mxu0 0.0
    %1407 = vmatprep.subr.mxu0 0.0
    %1408 = vmatpush1.msra.mxu0 0.0
    %1409 = vmatprep.subr.mxu0 0.0
    %1410 = vmatpush1.msra.mxu0 0.0
    %1411 = vmatprep.subr.mxu0 0.0
    %1412 = vmatpush1.msra.mxu0 0.0
    %1413 = vmatprep.subr.mxu0 0.0
    %1414 = vmatpush1.msra.mxu0 0.0
    %1415 = vmatprep.subr.mxu0 0.0
    %1416 = vmatpush1.msra.mxu0 0.0
    %1417 = vmatprep.subr.mxu0 0.0
    %1418 = vmatpush1.msra.mxu0 0.0
    %1419 = vmatprep.subr.mxu0 0.0
    %1420 = vmatpush1.msra.mxu0 0.0
    %1421 = vmatprep.subr.mxu0 0.0
    %1422 = vmatpush1.msra.mxu0 0.0
    %1423 = vmatprep.subr.mxu0 0.0
    %1424 = vmatpush1.msra.mxu0 0.0
    %1425 = vmatprep.subr.mxu0 0.0
    %1426 = vmatpush1.msra.mxu0 0.0
    %1427 = vmatprep.mubr.f32.mxu0 0.0
    %v1428 = vand.u32 %v918, 4294901760
    %1429 = vmatmul.mubr.f32.gmra.mrb[0].mxu0 %v1428
    %v1430 = vpop.f32.mrb[0].mxu0
    %v1431 = vadd.f32 %v1323, %v1430
    %v1432 = vpop.f32.mrb[0].mxu0
    %v1433 = vadd.f32 %v1325, %v1432
    %1434 = vmatprep.mubr.f32.mxu0 0.0
    %v1435 = vand.u32 %v921, 4294901760
    %1436 = vmatmul.mubr.f32.gmra.mrb[0].mxu0 %v1435
    %v1437 = vpop.f32.mrb[0].mxu0
    %v1438 = vadd.f32 %v1332, %v1437
    %v1439 = vpop.f32.mrb[0].mxu0
    %v1440 = vadd.f32 %v1334, %v1439
    %1441 = vmatprep.mubr.f32.mxu0 0.0
    %v1442 = vand.u32 %v924, 4294901760
    %1443 = vmatmul.mubr.f32.gmra.mrb[0].mxu0 %v1442
    %v1444 = vpop.f32.mrb[0].mxu0
    %v1445 = vadd.f32 %v1341, %v1444
    %v1446 = vpop.f32.mrb[0].mxu0
    %v1447 = vadd.f32 %v1343, %v1446
    %1448 = vdwg.mxu0
    %v1449 = vand.u32 %v914, 4294901760
    %1450 = vmatprep.subr.mxu0 %v1449
    %v1451 = vand.u32 %v913, 4294901760
    %1452 = vmatpush1.msra.mxu0 %v1451
    %v1453 = vand.u32 %v916, 4294901760
    %1454 = vmatprep.subr.mxu0 %v1453
    %v1455 = vand.u32 %v915, 4294901760
    %1456 = vmatpush1.msra.mxu0 %v1455
    %v1457 = vand.u32 %v817, 4294901760
    %1458 = vmatprep.subr.mxu0 %v1457
    %v1459 = vand.u32 %v816, 4294901760
    %1460 = vmatpush1.msra.mxu0 %v1459
    %1461 = vmatprep.subr.mxu0 0.0
    %1462 = vmatpush1.msra.mxu0 0.0
    %1463 = vmatprep.subr.mxu0 0.0
    %1464 = vmatpush1.msra.mxu0 0.0
    %1465 = vmatprep.subr.mxu0 0.0
    %1466 = vmatpush1.msra.mxu0 0.0
    %1467 = vmatprep.subr.mxu0 0.0
    %1468 = vmatpush1.msra.mxu0 0.0
    %1469 = vmatprep.subr.mxu0 0.0
    %1470 = vmatpush1.msra.mxu0 0.0
    %1471 = vmatprep.subr.mxu0 0.0
    %1472 = vmatpush1.msra.mxu0 0.0
    %1473 = vmatprep.subr.mxu0 0.0
    %1474 = vmatpush1.msra.mxu0 0.0
    %1475 = vmatprep.subr.mxu0 0.0
    %1476 = vmatpush1.msra.mxu0 0.0
    %1477 = vmatprep.subr.mxu0 0.0
    %1478 = vmatpush1.msra.mxu0 0.0
    %1479 = vmatprep.subr.mxu0 0.0
    %1480 = vmatpush1.msra.mxu0 0.0
    %1481 = vmatprep.subr.mxu0 0.0
    %1482 = vmatpush1.msra.mxu0 0.0
    %1483 = vmatprep.subr.mxu0 0.0
    %1484 = vmatpush1.msra.mxu0 0.0
    %1485 = vmatprep.subr.mxu0 0.0
    %1486 = vmatpush1.msra.mxu0 0.0
    %1487 = vmatprep.subr.mxu0 0.0
    %1488 = vmatpush1.msra.mxu0 0.0
    %1489 = vmatprep.subr.mxu0 0.0
    %1490 = vmatpush1.msra.mxu0 0.0
    %1491 = vmatprep.subr.mxu0 0.0
    %1492 = vmatpush1.msra.mxu0 0.0
    %1493 = vmatprep.subr.mxu0 0.0
    %1494 = vmatpush1.msra.mxu0 0.0
    %1495 = vmatprep.subr.mxu0 0.0
    %1496 = vmatpush1.msra.mxu0 0.0
    %1497 = vmatprep.subr.mxu0 0.0
    %1498 = vmatpush1.msra.mxu0 0.0
    %1499 = vmatprep.subr.mxu0 0.0
    %1500 = vmatpush1.msra.mxu0 0.0
    %1501 = vmatprep.subr.mxu0 0.0
    %1502 = vmatpush1.msra.mxu0 0.0
    %1503 = vmatprep.subr.mxu0 0.0
    %1504 = vmatpush1.msra.mxu0 0.0
    %1505 = vmatprep.subr.mxu0 0.0
    %1506 = vmatpush1.msra.mxu0 0.0
    %1507 = vmatprep.subr.mxu0 0.0
    %1508 = vmatpush1.msra.mxu0 0.0
    %1509 = vmatprep.subr.mxu0 0.0
    %1510 = vmatpush1.msra.mxu0 0.0
    %1511 = vmatprep.subr.mxu0 0.0
    %1512 = vmatpush1.msra.mxu0 0.0
    %1513 = vmatprep.subr.mxu0 0.0
    %1514 = vmatpush1.msra.mxu0 0.0
    %1515 = vmatprep.subr.mxu0 0.0
    %1516 = vmatpush1.msra.mxu0 0.0
    %1517 = vmatprep.subr.mxu0 0.0
    %1518 = vmatpush1.msra.mxu0 0.0
    %1519 = vmatprep.mubr.f32.mxu0 0.0
    %v1520 = vand.u32 %v918, 4294901760
    %1521 = vmatmul.mubr.f32.gmra.mrb[0].mxu0 %v1520
    %v1522 = vpop.f32.mrb[0].mxu0
    %v1523 = vadd.f32 %v1431, %v1522
    %v1524 = vpop.f32.mrb[0].mxu0
    %v1525 = vadd.f32 %v1433, %v1524
    %1526 = vmatprep.mubr.f32.mxu0 0.0
    %v1527 = vand.u32 %v921, 4294901760
    %1528 = vmatmul.mubr.f32.gmra.mrb[0].mxu0 %v1527
    %v1529 = vpop.f32.mrb[0].mxu0
    %v1530 = vadd.f32 %v1438, %v1529
    %v1531 = vpop.f32.mrb[0].mxu0
    %v1532 = vadd.f32 %v1440, %v1531
    %1533 = vmatprep.mubr.f32.mxu0 0.0
    %v1534 = vand.u32 %v924, 4294901760
    %1535 = vmatmul.mubr.f32.gmra.mrb[0].mxu0 %v1534
    %v1536 = vpop.f32.mrb[0].mxu0
    %v1537 = vadd.f32 %v1445, %v1536
    %v1538 = vpop.f32.mrb[0].mxu0
    %v1539 = vadd.f32 %v1447, %v1538
    %1540 = vdwg.mxu0
    %v1541 = vadd.f32 %v1523, 1e-10
    %v1542 = vadd.f32 %v1525, 1e-10
    %v1543 = vrcp.pop %v1541
    %v1544 = vrcp.pop %v1542
    %v1545 = vlaneseq
    %v1546 = vshrl.u32 %v1545, 7
    %v1547 = vsub.s32 3, %v1546
    %v1548 = vrot.slane %v1543, %v1547
    %v1549 = vlaneseq
    %v1550 = vshrl.u32 %v1549, 7
    %v1551 = vsub.s32 3, %v1550
    %v1552 = vrot.slane %v1544, %v1551
    %v1553 = vmul.f32 %v1523, %v1548
    %v1554 = vmul.f32 %v1525, %v1552
    %v1555 = vsel %vm154, %v1553, %v1523
    %v1556 = vsel %vm154, %v1554, %v1525
    %s1557 = scalar_lea.vmem [#allocation8], 48
    %1558 = vst [vmem:[%s1557] sm:$0xff] %v1555
    %1559 = vst [vmem:[%s1557 + $0x8] sm:$0xff] %v1556
    %1560 = vst [vmem:[%s1557 + $0x10] sm:$0xff] %v1530
    %1561 = vst [vmem:[%s1557 + $0x18] sm:$0xff] %v1532
    %1562 = vst [vmem:[%s1557 + $0x20] sm:$0xff] %v1537
    %1563 = vst [vmem:[%s1557 + $0x28] sm:$0xff] %v1539
    // Predicated region
    $region26: #{tpu_custom_call.1} parent=1 // pred_check
      _
    $region27: #{tpu_custom_call.1} parent=1 // pred_check_branch
      %1565 = sbr.rel (0) target = $region29
    $region28: #{tpu_custom_call.1} parent=1 // pred_region
      %s1567 = ssub.s32 1536, 1536
      %1568 = vsyncadd [#allocation4], %s1567
      %s1569 = sshll.u32 [#allocation8], 4
      %s1570 = int_to_ptr.vmem [resolvable:$true] %s1569
      %1575 = dma.vmem_to_hbm [thread:$0]  %s1570, 1536, %s3, [#allocation4], 256, 256, 16
    $region29: #{tpu_custom_call.1} parent=1 // pred_fallthru
      _
    // Predicated region
    $region30: #{tpu_custom_call.1} parent=1 // pred_check
      _
    $region31: #{tpu_custom_call.1} parent=1 // pred_check_branch
      %1577 = sbr.rel (0) target = $region33
    $region32: #{tpu_custom_call.1} parent=1 // pred_region
      %1578 = dma.done [#allocation4], 1536
    $region33: #{tpu_custom_call.1} parent=1 // pred_fallthru
      _
    %1579 = vsyncpa [#allocation3], 1
    %1580 = vsyncpa [#allocation6], 1
    %1581 = vsyncpa [#allocation4], 1

</llo_original>
